<compile_context>
chip_gen: v6e
topology: v6e:2x2x1
jax: 0.10.0
libtpu: 0.0.40
codegen_flags: <defaults>
</compile_context>

<pallas_src>
import functools

import numpy as np
import jax
import jax.numpy as jnp
from jax.experimental import pallas as pl
from jax.experimental.pallas import tpu as pltpu


def _adaptive_pool_plan(in_len: int, out_len: int):
    """Gather indices / weights equivalent to nn.AdaptiveAvgPool1d.

    pooled[j] = sum_r wgt[r, j] * x[idx[r, j]]   (r = 0 .. kmax-1)

    Returns (idx, wgt, kmax, uniform); `uniform` is True when every window has
    the same length (=> the weight slab is unnecessary: pool = sum * 1/kmax).
    """
    starts = [(j * in_len) // out_len for j in range(out_len)]
    ends = [-(-((j + 1) * in_len) // out_len) for j in range(out_len)]  # ceil
    lens = [e - s for s, e in zip(starts, ends)]
    kmax = max(lens)
    uniform = (min(lens) == kmax)
    idx = np.zeros((kmax, out_len), dtype=np.int32)
    wgt = np.zeros((kmax, out_len), dtype=np.float32)
    for j, (s, n) in enumerate(zip(starts, lens)):
        for r in range(kmax):
            idx[r, j] = s + min(r, n - 1)          # in-bounds dummy when r >= n
            wgt[r, j] = (1.0 / n) if r < n else 0.0
    return idx, wgt, kmax, uniform


def _adaptive_avg_pool_matrix(in_len: int, out_len: int) -> np.ndarray:
    """Dense (in_len, out_len) pooling matrix — used only by the JAX reference."""
    P = np.zeros((in_len, out_len), dtype=np.float32)
    for j in range(out_len):
        s = (j * in_len) // out_len
        e = -(-((j + 1) * in_len) // out_len)
        P[s:e, j] = 1.0 / (e - s)
    return P


def _conv_tail(pooled, w1_ref, b1_ref, w2_ref, b2_ref, o_ref):
    """Shared conv1+ReLU+conv2 tail.  pooled: (1, TBL)."""
    # Conv1d(1 -> n_ctx, k=1) + ReLU: lane-aligned FMA, sublane-broadcast pooled.
    h = jnp.maximum(w1_ref[...] * pooled + b1_ref[...], 0.0)          # (n_ctx, TBL)
    # Conv1d(n_ctx -> n_ctx, k=1): single MXU matmul with lane-dense N.
    out = jnp.dot(w2_ref[...], h, preferred_element_type=jnp.float32) + b2_ref[...]
    o_ref[...] = out.astype(o_ref.dtype)


def _image2prompts_kernel_uniform(kmax, inv_len,
                                  xg_ref, w1_ref, b1_ref, w2_ref, b2_ref, o_ref):
    # Uniform pooling windows: pool = (sum of kmax taps) * 1/kmax (no weight slab).
    pooled = xg_ref[0:1, :]                                           # (1, TBL)
    for r in range(1, kmax):
        pooled = pooled + xg_ref[r:r + 1, :]
    if kmax > 1:
        pooled = pooled * inv_len
    _conv_tail(pooled, w1_ref, b1_ref, w2_ref, b2_ref, o_ref)


def _image2prompts_kernel_weighted(kmax,
                                   xg_ref, wt_ref, w1_ref, b1_ref, w2_ref, b2_ref,
                                   o_ref):
    # Ragged pooling windows: VPU weighted sum over the kmax taps (kmax is tiny).
    prod = xg_ref[...] * wt_ref[...]                                  # (kmax, TBL)
    pooled = prod[0:1, :]
    for r in range(1, kmax):
        pooled = pooled + prod[r:r + 1, :]                            # (1, TBL)
    _conv_tail(pooled, w1_ref, b1_ref, w2_ref, b2_ref, o_ref)


def _pick_block_rows(batch, ctx_dim, n_ctx, kmax, has_wt, budget_bytes=12 << 20):
    """Rows per grid step: VMEM-budgeted (fits the smallest default scoped VMEM)
    and split so the grid has >= 2 tiles when batch > 1 (both v7x TensorCores
    get work on the "parallel" grid axis)."""
    if ctx_dim % 128 != 0:
        return batch                       # single full-array block stays legal
    bytes_per_row = 4 * ctx_dim * (2 * kmax                       # xg (2 buffers)
                                   + (2 * kmax if has_wt else 0)  # wt slab
                                   + 2 * 3 * n_ctx                # w1/b1/b2 slabs
                                   + 2 * n_ctx)                   # out (2 buffers)
    tb = max(1, min(batch, 128, budget_bytes // bytes_per_row))
    if batch > 1:
        tb = min(tb, -(-batch // 2))       # at least two grid tiles
    return int(tb)


def image2prompts(image_features, w1, b1, w2, b2, ctx_dim, block_rows=None):
    """image_features: (B, L).  Conv1d params as in the PyTorch module.
    Returns (B, n_ctx, ctx_dim) array with the input dtype."""
    B, L = image_features.shape
    n_ctx = w2.shape[0]
    dtype = image_features.dtype

    w1 = jnp.asarray(w1).reshape(n_ctx)
    b1 = jnp.asarray(b1).reshape(n_ctx)
    w2 = jnp.asarray(w2).reshape(n_ctx, n_ctx)
    b2 = jnp.asarray(b2).reshape(n_ctx)

    idx, wgt, kmax, uniform = _adaptive_pool_plan(L, ctx_dim)

    tb = block_rows if block_rows is not None else _pick_block_rows(
        B, ctx_dim, n_ctx, kmax, has_wt=not uniform)
    n_steps = -(-B // tb)
    b_pad = n_steps * tb
    tbl = tb * ctx_dim

    # ---- wrapper-side layout plumbing only (gather / reshape / transpose) ----
    # Window-gather x and flatten batch into the lane axis: (kmax, B*ctx_dim).
    if uniform and L == kmax * ctx_dim:
        # Non-overlapping contiguous windows: pure reshape/transpose (no gather).
        xg_flat = jnp.transpose(image_features.reshape(B, ctx_dim, kmax),
                                (2, 0, 1)).reshape(kmax, B * ctx_dim)
    else:
        xg = jnp.take(image_features, jnp.asarray(idx), axis=1)      # (B, kmax, ctx_dim)
        xg_flat = jnp.transpose(xg, (1, 0, 2)).reshape(kmax, B * ctx_dim)
    if b_pad > B:
        xg_flat = jnp.pad(xg_flat, ((0, 0), (0, (b_pad - B) * ctx_dim)))
    xg_flat = xg_flat.astype(dtype)

    # Grid-invariant parameter slabs, pre-broadcast to the tile's lane width.
    w1_slab = jnp.broadcast_to(w1[:, None], (n_ctx, tbl)).astype(dtype)
    b1_slab = jnp.broadcast_to(b1[:, None], (n_ctx, tbl)).astype(dtype)
    b2_slab = jnp.broadcast_to(b2[:, None], (n_ctx, tbl)).astype(dtype)
    w2m = w2.astype(dtype)

    xg_spec = pl.BlockSpec((kmax, tbl), lambda i: (0, i))
    param_spec = pl.BlockSpec((n_ctx, tbl), lambda i: (0, 0))
    w2_spec = pl.BlockSpec((n_ctx, n_ctx), lambda i: (0, 0))

    if uniform:
        kernel = functools.partial(_image2prompts_kernel_uniform, kmax, 1.0 / kmax)
        in_specs = [xg_spec, param_spec, param_spec, w2_spec, param_spec]
        args = (xg_flat, w1_slab, b1_slab, w2m, b2_slab)
        pool_flops = kmax
        wt_bytes = 0
    else:
        wt_slab = jnp.tile(jnp.asarray(wgt).astype(dtype), (1, tb))  # (kmax, tbl)
        kernel = functools.partial(_image2prompts_kernel_weighted, kmax)
        in_specs = [xg_spec, pl.BlockSpec((kmax, tbl), lambda i: (0, 0)),
                    param_spec, param_spec, w2_spec, param_spec]
        args = (xg_flat, wt_slab, w1_slab, b1_slab, w2m, b2_slab)
        pool_flops = 2 * kmax
        wt_bytes = 4 * kmax * tbl

    flops = b_pad * ctx_dim * (pool_flops + 3 * n_ctx + 2 * n_ctx * n_ctx)
    bytes_accessed = 4 * (kmax * b_pad * ctx_dim                       # xg
                          + 3 * n_ctx * tbl + n_ctx * n_ctx            # params
                          + n_ctx * b_pad * ctx_dim) + wt_bytes        # out + wt

    out_flat = pl.pallas_call(
        kernel,
        out_shape=jax.ShapeDtypeStruct((n_ctx, b_pad * ctx_dim), dtype),
        grid_spec=pltpu.PrefetchScalarGridSpec(
            num_scalar_prefetch=0,
            grid=(n_steps,),
            in_specs=in_specs,
            out_specs=pl.BlockSpec((n_ctx, tbl), lambda i: (0, i)),
        ),
        compiler_params=pltpu.CompilerParams(
            dimension_semantics=("parallel",)),
        cost_estimate=pl.CostEstimate(
            flops=int(flops), transcendentals=0, bytes_accessed=int(bytes_accessed)),
    )(*args)

    # (n_ctx, B*ctx_dim) -> (B, n_ctx, ctx_dim)   (layout plumbing only)
    out = out_flat[:, : B * ctx_dim].reshape(n_ctx, B, ctx_dim)
    return jnp.transpose(out, (1, 0, 2))


def _reference(image_features, w1, b1, w2, b2, ctx_dim):
    """Plain-JAX reference mirroring the PyTorch forward (independent pooling path)."""
    P = jnp.asarray(_adaptive_avg_pool_matrix(image_features.shape[1], ctx_dim))
    pooled = image_features @ P                                          # (B, ctx_dim)
    h = jnp.maximum(pooled[:, None, :] * w1[None, :, None] + b1[None, :, None], 0.0)
    out = jnp.einsum("oc,bcl->bol", w2, h) + b2[None, :, None]
    return out


if __name__ == "__main__":
    # Small, deterministic config (stand-ins for cfg.TRAINER.COOP.N_CTX / CLIP dims).
    B = 64         # batch (large enough to exercise the batched/tiled path)
    L = 256        # raw image-feature length fed to the adaptive pool
    ctx_dim = 128  # clip_model.ln_final.weight.shape[0]
    n_ctx = 16     # cfg.TRAINER.COOP.N_CTX

    key = jax.random.PRNGKey(0)
    kx, k1, k2, k3, k4 = jax.random.split(key, 5)

    image_features = jax.random.normal(kx, (B, L), dtype=jnp.float32)
    # Conv1d(1, n_ctx, 1): weight (n_ctx, 1, 1) -> (n_ctx,), bias (n_ctx,)
    w1 = jax.random.normal(k1, (n_ctx,), dtype=jnp.float32) * 0.1
    b1 = jax.random.normal(k2, (n_ctx,), dtype=jnp.float32) * 0.1
    # Conv1d(n_ctx, n_ctx, 1): weight (n_ctx, n_ctx, 1) -> (n_ctx, n_ctx), bias (n_ctx,)
    w2 = jax.random.normal(k3, (n_ctx, n_ctx), dtype=jnp.float32) * 0.1
    b2 = jax.random.normal(k4, (n_ctx,), dtype=jnp.float32) * 0.1

    out = image2prompts(image_features, w1, b1, w2, b2, ctx_dim)
    out = jax.block_until_ready(out)

    ref = _reference(image_features, w1, b1, w2, b2, ctx_dim)
    assert out.shape == (B, n_ctx, ctx_dim)
    np.testing.assert_allclose(np.asarray(out), np.asarray(ref), rtol=1e-5, atol=1e-5)

    # Also exercise a ragged-window config (L not a multiple of ctx_dim).
    xr = jax.random.normal(kx, (5, 200), dtype=jnp.float32)
    out_r = jax.block_until_ready(image2prompts(xr, w1, b1, w2, b2, ctx_dim))
    np.testing.assert_allclose(np.asarray(out_r),
                               np.asarray(_reference(xr, w1, b1, w2, b2, ctx_dim)),
                               rtol=1e-5, atol=1e-5)

    print("KERNEL_OK")
</pallas_src>

<mosaic_0001>
module attributes {stable_mosaic.version = 11 : i64} {
  func.func @_image2prompts_kernel_uniform(%arg0: i32, %arg1: memref<2x4096xf32, #tpu.memory_space<vmem>>, %arg2: memref<16x4096xf32, #tpu.memory_space<vmem>>, %arg3: memref<16x4096xf32, #tpu.memory_space<vmem>>, %arg4: memref<16x16xf32, #tpu.memory_space<vmem>>, %arg5: memref<16x4096xf32, #tpu.memory_space<vmem>>, %arg6: memref<16x4096xf32, #tpu.memory_space<vmem>>) attributes {dimension_semantics = [#tpu.dimension_semantics<parallel>], iteration_bounds = array<i64: 2>, scalar_prefetch = 0 : i64, scratch_operands = 0 : i64, tpu.core_type = #tpu.core_type<tc>, window_params = [{transform_indices = @transform_0, window_bounds = array<i64: 2, 4096>}, {pipeline_mode = #tpu.pipeline_mode<synchronous>, transform_indices = @transform_1, window_bounds = array<i64: 16, 4096>}, {pipeline_mode = #tpu.pipeline_mode<synchronous>, transform_indices = @transform_2, window_bounds = array<i64: 16, 4096>}, {pipeline_mode = #tpu.pipeline_mode<synchronous>, transform_indices = @transform_3, window_bounds = array<i64: 16, 16>}, {pipeline_mode = #tpu.pipeline_mode<synchronous>, transform_indices = @transform_4, window_bounds = array<i64: 16, 4096>}, {transform_indices = @transform_5, window_bounds = array<i64: 16, 4096>}]} {
    %c0 = arith.constant 0 : index
    %c0_0 = arith.constant 0 : index
    %0 = vector.load %arg1[%c0, %c0_0] : memref<2x4096xf32, #tpu.memory_space<vmem>>, vector<1x4096xf32>
    %c1 = arith.constant 1 : index
    %c0_1 = arith.constant 0 : index
    %1 = vector.load %arg1[%c1, %c0_1] : memref<2x4096xf32, #tpu.memory_space<vmem>>, vector<1x4096xf32>
    %2 = arith.addf %0, %1 : vector<1x4096xf32>
    %cst = arith.constant 5.000000e-01 : f32
    %3 = vector.broadcast %cst : f32 to vector<1x4096xf32>
    %4 = arith.mulf %2, %3 : vector<1x4096xf32>
    %c0_2 = arith.constant 0 : index
    %c0_3 = arith.constant 0 : index
    %5 = vector.load %arg2[%c0_2, %c0_3] : memref<16x4096xf32, #tpu.memory_space<vmem>>, vector<16x4096xf32>
    %6 = vector.broadcast %4 : vector<1x4096xf32> to vector<16x4096xf32>
    %7 = arith.mulf %5, %6 : vector<16x4096xf32>
    %c0_4 = arith.constant 0 : index
    %c0_5 = arith.constant 0 : index
    %8 = vector.load %arg3[%c0_4, %c0_5] : memref<16x4096xf32, #tpu.memory_space<vmem>>, vector<16x4096xf32>
    %9 = arith.addf %7, %8 : vector<16x4096xf32>
    %cst_6 = arith.constant 0.000000e+00 : f32
    %10 = vector.broadcast %cst_6 : f32 to vector<16x4096xf32>
    %11 = arith.maximumf %9, %10 : vector<16x4096xf32>
    %c0_7 = arith.constant 0 : index
    %c0_8 = arith.constant 0 : index
    %12 = vector.load %arg4[%c0_7, %c0_8] : memref<16x16xf32, #tpu.memory_space<vmem>>, vector<16x16xf32>
    %cst_9 = arith.constant dense<0.000000e+00> : vector<16x4096xf32>
    %13 = tpu.matmul %12, %11, %cst_9 {dimension_numbers = #tpu.dot_dimension_numbers<[1], [0], [0], [1], [0, 0, 1, 1], [], []>} : vector<16x16xf32>, vector<16x4096xf32>, vector<16x4096xf32> -> vector<16x4096xf32>
    %c0_10 = arith.constant 0 : index
    %c0_11 = arith.constant 0 : index
    %14 = vector.load %arg5[%c0_10, %c0_11] : memref<16x4096xf32, #tpu.memory_space<vmem>>, vector<16x4096xf32>
    %15 = arith.addf %13, %14 : vector<16x4096xf32>
    %c0_12 = arith.constant 0 : index
    %c0_13 = arith.constant 0 : index
    %16 = vector.load %arg6[%c0_12, %c0_13] : memref<16x4096xf32, #tpu.memory_space<vmem>>, vector<16x4096xf32>
    tpu.vector_store %arg6[%c0_12, %c0_13], %15 {strides = array<i32>} : memref<16x4096xf32, #tpu.memory_space<vmem>>, vector<16x4096xf32>,
    return
  }
  func.func @transform_0(%arg0: i32) -> (i32, i32) {
    %c0_i32 = arith.constant 0 : i32
    %c0_i32_0 = arith.constant 0 : i32
    return %c0_i32, %arg0 : i32, i32
  }
  func.func @transform_1(%arg0: i32) -> (i32, i32) {
    %c0_i32 = arith.constant 0 : i32
    %c0_i32_0 = arith.constant 0 : i32
    %c0_i32_1 = arith.constant 0 : i32
    return %c0_i32, %c0_i32_0 : i32, i32
  }
  func.func @transform_2(%arg0: i32) -> (i32, i32) {
    %c0_i32 = arith.constant 0 : i32
    %c0_i32_0 = arith.constant 0 : i32
    %c0_i32_1 = arith.constant 0 : i32
    return %c0_i32, %c0_i32_0 : i32, i32
  }
  func.func @transform_3(%arg0: i32) -> (i32, i32) {
    %c0_i32 = arith.constant 0 : i32
    %c0_i32_0 = arith.constant 0 : i32
    %c0_i32_1 = arith.constant 0 : i32
    return %c0_i32, %c0_i32_0 : i32, i32
  }
  func.func @transform_4(%arg0: i32) -> (i32, i32) {
    %c0_i32 = arith.constant 0 : i32
    %c0_i32_0 = arith.constant 0 : i32
    %c0_i32_1 = arith.constant 0 : i32
    return %c0_i32, %c0_i32_0 : i32, i32
  }
  func.func @transform_5(%arg0: i32) -> (i32, i32) {
    %c0_i32 = arith.constant 0 : i32
    %c0_i32_0 = arith.constant 0 : i32
    return %c0_i32, %arg0 : i32, i32
  }
}

</mosaic_0001>

<llo_original>
// kernel: tpu_custom_call.1
$region0: #{tpu_custom_call.1}
  #allocation0 [shape = 'u32[]', space=smem, size = 0x4, offset = 0x4, fixed_abs, tag = 'smem constant byte address 0x4 - core index']
  #allocation1 [shape = 'u32[144,128]{1,0:T(1,128)}', space=vmem, size = 0x12000, scoped, tag = 'internal scratch']
  %s0 = inlined_call_operand.hbm [shape: f32[2,8192], index: 0, kind: input, shape index: {}]
  %s1 = inlined_call_operand.hbm [shape: f32[16,4096], index: 1, kind: input, shape index: {}]
  %s2 = inlined_call_operand.hbm [shape: f32[16,4096], index: 2, kind: input, shape index: {}]
  %s3 = inlined_call_operand.hbm [shape: f32[16,16], index: 3, kind: input, shape index: {}]
  %s4 = inlined_call_operand.hbm [shape: f32[16,4096], index: 4, kind: input, shape index: {}]
  %s5 = inlined_call_operand.hbm [shape: f32[16,8192], index: 5, kind: output, shape index: {}]
  %s6 = sld [smem:[#allocation0]]
  $region73: #{tpu_custom_call.1} parent=0
    _
  %s8 = ssub.s32 1, %s6
  %s9 = scalar_select 0, %s8, %s6
  $region1: #{tpu_custom_call.1} parent=0
    #allocation2 [shape = 'u8[65536]{0}', space=vmem, size = 0x10000, scoped, tag = 'input window, operand 0']
    #allocation3 [shape = 's32[2]{0}', space=sflag, size = 0x8, scoped, tag = 'scoped memory for tpu_custom_call.1']
    #allocation4 [shape = 's32[2]{0}', space=sflag, size = 0x8, scoped, tag = 'scoped memory for tpu_custom_call.1']
    #allocation5 [shape = 'u8[262144]{0}', space=vmem, size = 0x40000, scoped, tag = 'input window, operand 1, single buffered']
    #allocation6 [shape = 's32[1]{0}', space=sflag, size = 0x4, scoped, tag = 'scoped memory for tpu_custom_call.1']
    #allocation7 [shape = 'u8[262144]{0}', space=vmem, size = 0x40000, scoped, tag = 'input window, operand 2, single buffered']
    #allocation8 [shape = 'u8[8192]{0}', space=vmem, size = 0x2000, scoped, tag = 'input window, operand 3, single buffered']
    #allocation9 [shape = 's32[1]{0}', space=sflag, size = 0x4, scoped, tag = 'scoped memory for tpu_custom_call.1']
    #allocation10 [shape = 'u8[262144]{0}', space=vmem, size = 0x40000, scoped, tag = 'input window, operand 4, single buffered']
    #allocation11 [shape = 'u8[524288]{0}', space=vmem, size = 0x80000, scoped, tag = 'output window, operand 0']
    %10 = vsyncpa [#allocation3], 0
    %s11 = scalar_lea.sflag [#allocation3], 1
    %12 = vsyncpa %s11, 0
    %13 = vsyncpa [#allocation6], 0
    %14 = vsyncpa [#allocation9], 0
    %15 = vsyncpa [#allocation4], 0
    %s16 = scalar_lea.sflag [#allocation4], 1
    %17 = vsyncpa %s16, 0
    loop: start=0, step=1, limit=4
    $region2: #{tpu_custom_call.1} parent=1 // loop_pre_header
      _
    $region3: #{tpu_custom_call.1} parent=1 // loop_header
      %s19 = sphi 0, %s23
      %p20 = scmp.ge.s32.totalorder %s19, 4
      %s29 = sphi 0, %s31
      %s32 = sphi 0, %s29
      %s33 = sphi 0, %s32
      %s49 = sphi 0, %s33
      %s53 = sphi 0, %s53
      %s55 = sphi 0, %s53
      %s56 = sphi 0, %s55
      %s70 = sphi 0, %s56
      %s74 = sphi 0, %s74
      %s76 = sphi 0, %s74
      %s77 = sphi 0, %s76
      %s91 = sphi 0, %s77
      %s95 = sphi 0, %s95
      %s97 = sphi 0, %s95
      %s98 = sphi 0, %s97
      %s112 = sphi 0, %s98
      %s116 = sphi 0, %s116
      %s118 = sphi 0, %s116
      %s119 = sphi 0, %s118
      %s133 = sphi 0, %s119
      %s139 = sphi 0, %s141
      %s142 = sphi 0, %s139
      %s143 = sphi 0, %s142
      %s159 = sphi 0, %s143
    $region4: #{tpu_custom_call.1} parent=1 // loop_header_branch
      %22 = sbr.rel (%p20) target = $region8
    $region5: #{tpu_custom_call.1} parent=1 // loop_body
      %s24 = ssub.s32 %s19, 1
      %s25 = ssub.s32 %s19, 2
      %s26 = sadd.s32 %s19, 1
      %s27 = ssub.s32 %s19, %s26
      %p28 = scmp.eq.s32.totalorder %s27, 0
      %s30 = sadd.s32 %s29, 1
      %s31 = scalar_select %p28, %s29, %s30
      %p34 = pneg %p28
      %p35 = scmp.eq.s32.totalorder %s19, 1
      %p36 = por %p34, %p35
      %p37 = scmp.ne.s32.totalorder %s29, %s32
      %p38 = scmp.eq.s32.totalorder %s19, 0
      %p39 = por %p37, %p38
      %p40 = scmp.ne.s32.totalorder %s29, %s32
      %p41 = scmp.eq.s32.totalorder %s24, 1
      %p42 = por %p40, %p41
      %p43 = scmp.ne.s32.totalorder %s32, %s33
      %p44 = scmp.eq.s32.totalorder %s24, 0
      %p45 = por %p43, %p44
      %p46 = scmp.ne.s32.totalorder %s32, %s33
      %p47 = scmp.eq.s32.totalorder %s25, 1
      %p48 = por %p46, %p47
      %p50 = scmp.ne.s32.totalorder %s33, %s49
      %p51 = scmp.eq.s32.totalorder %s25, 0
      %p52 = por %p50, %p51
      %s54 = sadd.s32 %s53, 1
      %p57 = scmp.eq.s32.totalorder %s19, 1
      %p58 = scmp.ne.s32.totalorder %s53, %s55
      %p59 = scmp.eq.s32.totalorder %s19, 0
      %p60 = por %p58, %p59
      %p61 = scmp.ne.s32.totalorder %s53, %s55
      %p62 = scmp.eq.s32.totalorder %s24, 1
      %p63 = por %p61, %p62
      %p64 = scmp.ne.s32.totalorder %s55, %s56
      %p65 = scmp.eq.s32.totalorder %s24, 0
      %p66 = por %p64, %p65
      %p67 = scmp.ne.s32.totalorder %s55, %s56
      %p68 = scmp.eq.s32.totalorder %s25, 1
      %p69 = por %p67, %p68
      %p71 = scmp.ne.s32.totalorder %s56, %s70
      %p72 = scmp.eq.s32.totalorder %s25, 0
      %p73 = por %p71, %p72
      %s75 = sadd.s32 %s74, 1
      %p78 = scmp.eq.s32.totalorder %s19, 1
      %p79 = scmp.ne.s32.totalorder %s74, %s76
      %p80 = scmp.eq.s32.totalorder %s19, 0
      %p81 = por %p79, %p80
      %p82 = scmp.ne.s32.totalorder %s74, %s76
      %p83 = scmp.eq.s32.totalorder %s24, 1
      %p84 = por %p82, %p83
      %p85 = scmp.ne.s32.totalorder %s76, %s77
      %p86 = scmp.eq.s32.totalorder %s24, 0
      %p87 = por %p85, %p86
      %p88 = scmp.ne.s32.totalorder %s76, %s77
      %p89 = scmp.eq.s32.totalorder %s25, 1
      %p90 = por %p88, %p89
      %p92 = scmp.ne.s32.totalorder %s77, %s91
      %p93 = scmp.eq.s32.totalorder %s25, 0
      %p94 = por %p92, %p93
      %s96 = sadd.s32 %s95, 1
      %p99 = scmp.eq.s32.totalorder %s19, 1
      %p100 = scmp.ne.s32.totalorder %s95, %s97
      %p101 = scmp.eq.s32.totalorder %s19, 0
      %p102 = por %p100, %p101
      %p103 = scmp.ne.s32.totalorder %s95, %s97
      %p104 = scmp.eq.s32.totalorder %s24, 1
      %p105 = por %p103, %p104
      %p106 = scmp.ne.s32.totalorder %s97, %s98
      %p107 = scmp.eq.s32.totalorder %s24, 0
      %p108 = por %p106, %p107
      %p109 = scmp.ne.s32.totalorder %s97, %s98
      %p110 = scmp.eq.s32.totalorder %s25, 1
      %p111 = por %p109, %p110
      %p113 = scmp.ne.s32.totalorder %s98, %s112
      %p114 = scmp.eq.s32.totalorder %s25, 0
      %p115 = por %p113, %p114
      %s117 = sadd.s32 %s116, 1
      %p120 = scmp.eq.s32.totalorder %s19, 1
      %p121 = scmp.ne.s32.totalorder %s116, %s118
      %p122 = scmp.eq.s32.totalorder %s19, 0
      %p123 = por %p121, %p122
      %p124 = scmp.ne.s32.totalorder %s116, %s118
      %p125 = scmp.eq.s32.totalorder %s24, 1
      %p126 = por %p124, %p125
      %p127 = scmp.ne.s32.totalorder %s118, %s119
      %p128 = scmp.eq.s32.totalorder %s24, 0
      %p129 = por %p127, %p128
      %p130 = scmp.ne.s32.totalorder %s118, %s119
      %p131 = scmp.eq.s32.totalorder %s25, 1
      %p132 = por %p130, %p131
      %p134 = scmp.ne.s32.totalorder %s119, %s133
      %p135 = scmp.eq.s32.totalorder %s25, 0
      %p136 = por %p134, %p135
      %s137 = ssub.s32 %s19, %s26
      %p138 = scmp.eq.s32.totalorder %s137, 0
      %s140 = sadd.s32 %s139, 1
      %s141 = scalar_select %p138, %s139, %s140
      %p144 = pneg %p138
      %p145 = scmp.eq.s32.totalorder %s19, 1
      %p146 = por %p144, %p145
      %p147 = scmp.ne.s32.totalorder %s139, %s142
      %p148 = scmp.eq.s32.totalorder %s19, 0
      %p149 = por %p147, %p148
      %p150 = scmp.ne.s32.totalorder %s139, %s142
      %p151 = scmp.eq.s32.totalorder %s24, 1
      %p152 = por %p150, %p151
      %p153 = scmp.ne.s32.totalorder %s142, %s143
      %p154 = scmp.eq.s32.totalorder %s24, 0
      %p155 = por %p153, %p154
      %p156 = scmp.ne.s32.totalorder %s142, %s143
      %p157 = scmp.eq.s32.totalorder %s25, 1
      %p158 = por %p156, %p157
      %p160 = scmp.ne.s32.totalorder %s143, %s159
      %p161 = scmp.eq.s32.totalorder %s25, 0
      %p162 = por %p160, %p161
      %p163 = scmp.le.s32.totalorder 1, %s19
      %p164 = scmp.lt.s32.totalorder %s19, 3
      %p165 = pnand %p163, %p164
      %p166 = pneg %p165
      // Predicated region
      $region9: #{tpu_custom_call.1} parent=5 // pred_check
        _
      $region10: #{tpu_custom_call.1} parent=5 // pred_check_branch
        %168 = sbr.rel (%p165) target = $region12
      $region11: #{tpu_custom_call.1} parent=5 // pred_region
        %s169 = ssub.s32 %s19, 1
        // Predicated region
        $region13: #{tpu_custom_call.1} parent=11 // pred_check
          %p170 = pneg %p66
        $region14: #{tpu_custom_call.1} parent=11 // pred_check_branch
          %172 = sbr.rel (%p170) target = $region16
        $region15: #{tpu_custom_call.1} parent=11 // pred_region
          %s174 = ssub.s32 8192, 8192
          %175 = vsyncadd [#allocation6], %s174
          %s176 = sshll.u32 [#allocation5], 4
          %s177 = int_to_ptr.vmem [resolvable:$true] %s176
          %182 = dma.hbm_to_vmem [thread:$0]  %s1, 8192, %s177, [#allocation6], 4096, 4096, 256
        $region16: #{tpu_custom_call.1} parent=11 // pred_fallthru
          _
        // Predicated region
        $region17: #{tpu_custom_call.1} parent=11 // pred_check
          %p183 = pneg %p87
        $region18: #{tpu_custom_call.1} parent=11 // pred_check_branch
          %185 = sbr.rel (%p183) target = $region20
        $region19: #{tpu_custom_call.1} parent=11 // pred_region
          %s187 = ssub.s32 8192, 8192
          %188 = vsyncadd [#allocation6], %s187
          %s189 = sshll.u32 [#allocation7], 4
          %s190 = int_to_ptr.vmem [resolvable:$true] %s189
          %195 = dma.hbm_to_vmem [thread:$0]  %s2, 8192, %s190, [#allocation6], 4096, 4096, 256
        $region20: #{tpu_custom_call.1} parent=11 // pred_fallthru
          _
        // Predicated region
        $region21: #{tpu_custom_call.1} parent=11 // pred_check
          %p196 = pneg %p108
        $region22: #{tpu_custom_call.1} parent=11 // pred_check_branch
          %198 = sbr.rel (%p196) target = $region24
        $region23: #{tpu_custom_call.1} parent=11 // pred_region
          %s200 = ssub.s32 256, 256
          %201 = vsyncadd [#allocation9], %s200
          %s202 = sshll.u32 [#allocation8], 4
          %s203 = int_to_ptr.vmem [resolvable:$true] %s202
          %208 = dma.hbm_to_vmem [thread:$0]  %s3, 256, %s203, [#allocation9], 128, 128, 8
        $region24: #{tpu_custom_call.1} parent=11 // pred_fallthru
          _
        // Predicated region
        $region25: #{tpu_custom_call.1} parent=11 // pred_check
          %p209 = pneg %p129
        $region26: #{tpu_custom_call.1} parent=11 // pred_check_branch
          %211 = sbr.rel (%p209) target = $region28
        $region27: #{tpu_custom_call.1} parent=11 // pred_region
          %s213 = ssub.s32 8192, 8192
          %214 = vsyncadd [#allocation9], %s213
          %s215 = sshll.u32 [#allocation10], 4
          %s216 = int_to_ptr.vmem [resolvable:$true] %s215
          %221 = dma.hbm_to_vmem [thread:$0]  %s4, 8192, %s216, [#allocation9], 4096, 4096, 256
        $region28: #{tpu_custom_call.1} parent=11 // pred_fallthru
          _
      $region12: #{tpu_custom_call.1} parent=5 // pred_fallthru
        _
      %p222 = scmp.lt.s32.totalorder %s19, 2
      // Predicated region
      $region29: #{tpu_custom_call.1} parent=5 // pred_check
        %p223 = pneg %p222
      $region30: #{tpu_custom_call.1} parent=5 // pred_check_branch
        %225 = sbr.rel (%p223) target = $region32
      $region31: #{tpu_custom_call.1} parent=5 // pred_region
        // Predicated region
        $region33: #{tpu_custom_call.1} parent=31 // pred_check
          %p226 = pneg %p39
        $region34: #{tpu_custom_call.1} parent=31 // pred_check_branch
          %228 = sbr.rel (%p226) target = $region36
        $region35: #{tpu_custom_call.1} parent=31 // pred_region
          %s229 = sand.u32 %s29, 1
          %s230 = scalar_lea.sflag [#allocation3], %s229
          %s231 = sand.u32 %s29, 1
          %s232 = smul.addr %s231, 64
          %s233 = scalar_lea.vmem [#allocation2], %s232
          %s234 = smul.u32 32, %s19
          %s236 = ssub.s32 1024, 1024
          %237 = vsyncadd %s230, %s236
          %s238 = smul.addr %s234, 32
          %s239 = scalar_lea.hbm %s0, %s238
          %s241 = sshll.u32 %s233, 4
          %s242 = int_to_ptr.vmem [resolvable:$true] %s241
          %244 = dma.hbm_to_vmem [thread:$0]  %s239, 1024, %s242, %s230
        $region36: #{tpu_custom_call.1} parent=31 // pred_fallthru
          _
      $region32: #{tpu_custom_call.1} parent=5 // pred_fallthru
        _
      %p245 = scmp.le.s32.totalorder 1, %s19
      %p246 = scmp.lt.s32.totalorder %s19, 3
      %p247 = pnand %p245, %p246
      %p248 = pneg %p247
      // Predicated region
      $region37: #{tpu_custom_call.1} parent=5 // pred_check
        _
      $region38: #{tpu_custom_call.1} parent=5 // pred_check_branch
        %250 = sbr.rel (%p247) target = $region40
      $region39: #{tpu_custom_call.1} parent=5 // pred_region
        %s251 = ssub.s32 %s19, 1
        %s252 = sand.u32 %s32, 1
        %s253 = scalar_lea.sflag [#allocation3], %s252
        %s254 = sand.u32 %s32, 1
        %s255 = smul.addr %s254, 64
        %s256 = scalar_lea.vmem [#allocation2], %s255
        // Predicated region
        $region41: #{tpu_custom_call.1} parent=39 // pred_check
          %p257 = pneg %p45
        $region42: #{tpu_custom_call.1} parent=39 // pred_check_branch
          %259 = sbr.rel (%p257) target = $region44
        $region43: #{tpu_custom_call.1} parent=39 // pred_region
          %260 = dma.done %s253, 1024
        $region44: #{tpu_custom_call.1} parent=39 // pred_fallthru
          _
        // Predicated region
        $region45: #{tpu_custom_call.1} parent=39 // pred_check
          %p261 = pneg %p66
        $region46: #{tpu_custom_call.1} parent=39 // pred_check_branch
          %263 = sbr.rel (%p261) target = $region48
        $region47: #{tpu_custom_call.1} parent=39 // pred_region
          %264 = dma.done [#allocation6], 8192
        $region48: #{tpu_custom_call.1} parent=39 // pred_fallthru
          _
        // Predicated region
        $region49: #{tpu_custom_call.1} parent=39 // pred_check
          %p265 = pneg %p87
        $region50: #{tpu_custom_call.1} parent=39 // pred_check_branch
          %267 = sbr.rel (%p265) target = $region52
        $region51: #{tpu_custom_call.1} parent=39 // pred_region
          %268 = dma.done [#allocation6], 8192
        $region52: #{tpu_custom_call.1} parent=39 // pred_fallthru
          _
        // Predicated region
        $region53: #{tpu_custom_call.1} parent=39 // pred_check
          %p269 = pneg %p108
        $region54: #{tpu_custom_call.1} parent=39 // pred_check_branch
          %271 = sbr.rel (%p269) target = $region56
        $region55: #{tpu_custom_call.1} parent=39 // pred_region
          %272 = dma.done [#allocation9], 256
        $region56: #{tpu_custom_call.1} parent=39 // pred_fallthru
          _
        // Predicated region
        $region57: #{tpu_custom_call.1} parent=39 // pred_check
          %p273 = pneg %p129
        $region58: #{tpu_custom_call.1} parent=39 // pred_check_branch
          %275 = sbr.rel (%p273) target = $region60
        $region59: #{tpu_custom_call.1} parent=39 // pred_region
          %276 = dma.done [#allocation9], 8192
        $region60: #{tpu_custom_call.1} parent=39 // pred_fallthru
          _
        %s277 = sand.u32 %s32, 1
        %s278 = scalar_lea.sflag [#allocation3], %s277
        %s279 = sand.u32 %s32, 1
        %s280 = smul.addr %s279, 64
        %s281 = scalar_lea.vmem [#allocation2], %s280
        %p282 = pneg %p45
        %p283 = pneg %p42
        %p284 = pneg %p66
        %p285 = pneg %p63
        %p286 = pneg %p87
        %p287 = pneg %p84
        %p288 = pneg %p108
        %p289 = pneg %p105
        %p290 = pneg %p129
        %p291 = pneg %p126
        %p292 = pneg %p155
        %p293 = pneg %p152
        %s294 = sand.u32 %s142, 1
        %s295 = scalar_lea.sflag [#allocation4], %s294
        %s296 = sand.u32 %s142, 1
        %s297 = smul.addr %s296, 512
        %s298 = scalar_lea.vmem [#allocation11], %s297
        %s299 = smul.u32 32, %s24
        %s300 = smul.u32 32, %s24
        %v301 = vld [vmem:[%s256] ss:$2 sm:$0xff]
        %s302 = scalar_lea.vmem %s256, 16 [#allocation2]
        %v303 = vld [vmem:[%s302] ss:$2 sm:$0xff]
        %s304 = scalar_lea.vmem %s256, 32 [#allocation2]
        %v305 = vld [vmem:[%s304] ss:$2 sm:$0xff]
        %s306 = scalar_lea.vmem %s256, 48 [#allocation2]
        %v307 = vld [vmem:[%s306] ss:$2 sm:$0xff]
        %s308 = scalar_lea.vmem %s256, 1 [#allocation2]
        %v309 = vld [vmem:[%s308] ss:$2 sm:$0xff]
        %s310 = scalar_lea.vmem %s256, 17 [#allocation2]
        %v311 = vld [vmem:[%s310] ss:$2 sm:$0xff]
        %s312 = scalar_lea.vmem %s256, 33 [#allocation2]
        %v313 = vld [vmem:[%s312] ss:$2 sm:$0xff]
        %s314 = scalar_lea.vmem %s256, 49 [#allocation2]
        %v315 = vld [vmem:[%s314] ss:$2 sm:$0xff]
        %v316 = vadd.f32 %v301, %v309
        %v317 = vadd.f32 %v303, %v311
        %v318 = vadd.f32 %v305, %v313
        %v319 = vadd.f32 %v307, %v315
        %v320 = vmul.f32 %v316, 0.5
        %v321 = vmul.f32 %v317, 0.5
        %v322 = vmul.f32 %v318, 0.5
        %v323 = vmul.f32 %v319, 0.5
        %v324 = vld [vmem:[#allocation5] sm:$0xff]
        %v325 = vld [vmem:[#allocation5 + $0x8] sm:$0xff]
        %v326 = vld [vmem:[#allocation5 + $0x10] sm:$0xff]
        %v327 = vld [vmem:[#allocation5 + $0x18] sm:$0xff]
        %v328 = vld [vmem:[#allocation5 + $0x20] sm:$0xff]
        %v329 = vld [vmem:[#allocation5 + $0x28] sm:$0xff]
        %v330 = vld [vmem:[#allocation5 + $0x30] sm:$0xff]
        %v331 = vld [vmem:[#allocation5 + $0x38] sm:$0xff]
        %v332 = vld [vmem:[#allocation5 + $0x40] sm:$0xff]
        %v333 = vld [vmem:[#allocation5 + $0x48] sm:$0xff]
        %v334 = vld [vmem:[#allocation5 + $0x50] sm:$0xff]
        %v335 = vld [vmem:[#allocation5 + $0x58] sm:$0xff]
        %v336 = vld [vmem:[#allocation5 + $0x60] sm:$0xff]
        %v337 = vld [vmem:[#allocation5 + $0x68] sm:$0xff]
        %v338 = vld [vmem:[#allocation5 + $0x70] sm:$0xff]
        %v339 = vld [vmem:[#allocation5 + $0x78] sm:$0xff]
        %v340 = vld [vmem:[#allocation5 + $0x80] sm:$0xff]
        %v341 = vld [vmem:[#allocation5 + $0x88] sm:$0xff]
        %v342 = vld [vmem:[#allocation5 + $0x90] sm:$0xff]
        %v343 = vld [vmem:[#allocation5 + $0x98] sm:$0xff]
        %v344 = vld [vmem:[#allocation5 + $0xa0] sm:$0xff]
        %v345 = vld [vmem:[#allocation5 + $0xa8] sm:$0xff]
        %v346 = vld [vmem:[#allocation5 + $0xb0] sm:$0xff]
        %v347 = vld [vmem:[#allocation5 + $0xb8] sm:$0xff]
        %v348 = vld [vmem:[#allocation5 + $0xc0] sm:$0xff]
        %v349 = vld [vmem:[#allocation5 + $0xc8] sm:$0xff]
        %v350 = vld [vmem:[#allocation5 + $0xd0] sm:$0xff]
        %v351 = vld [vmem:[#allocation5 + $0xd8] sm:$0xff]
        %v352 = vld [vmem:[#allocation5 + $0xe0] sm:$0xff]
        %v353 = vld [vmem:[#allocation5 + $0xe8] sm:$0xff]
        %v354 = vld [vmem:[#allocation5 + $0xf0] sm:$0xff]
        %v355 = vld [vmem:[#allocation5 + $0xf8] sm:$0xff]
        %v356 = vld [vmem:[#allocation5 + $0x100] sm:$0xff]
        %v357 = vld [vmem:[#allocation5 + $0x108] sm:$0xff]
        %v358 = vld [vmem:[#allocation5 + $0x110] sm:$0xff]
        %v359 = vld [vmem:[#allocation5 + $0x118] sm:$0xff]
        %v360 = vld [vmem:[#allocation5 + $0x120] sm:$0xff]
        %v361 = vld [vmem:[#allocation5 + $0x128] sm:$0xff]
        %v362 = vld [vmem:[#allocation5 + $0x130] sm:$0xff]
        %v363 = vld [vmem:[#allocation5 + $0x138] sm:$0xff]
        %v364 = vld [vmem:[#allocation5 + $0x140] sm:$0xff]
        %v365 = vld [vmem:[#allocation5 + $0x148] sm:$0xff]
        %v366 = vld [vmem:[#allocation5 + $0x150] sm:$0xff]
        %v367 = vld [vmem:[#allocation5 + $0x158] sm:$0xff]
        %v368 = vld [vmem:[#allocation5 + $0x160] sm:$0xff]
        %v369 = vld [vmem:[#allocation5 + $0x168] sm:$0xff]
        %v370 = vld [vmem:[#allocation5 + $0x170] sm:$0xff]
        %v371 = vld [vmem:[#allocation5 + $0x178] sm:$0xff]
        %v372 = vld [vmem:[#allocation5 + $0x180] sm:$0xff]
        %v373 = vld [vmem:[#allocation5 + $0x188] sm:$0xff]
        %v374 = vld [vmem:[#allocation5 + $0x190] sm:$0xff]
        %v375 = vld [vmem:[#allocation5 + $0x198] sm:$0xff]
        %v376 = vld [vmem:[#allocation5 + $0x1a0] sm:$0xff]
        %v377 = vld [vmem:[#allocation5 + $0x1a8] sm:$0xff]
        %v378 = vld [vmem:[#allocation5 + $0x1b0] sm:$0xff]
        %v379 = vld [vmem:[#allocation5 + $0x1b8] sm:$0xff]
        %v380 = vld [vmem:[#allocation5 + $0x1c0] sm:$0xff]
        %v381 = vld [vmem:[#allocation5 + $0x1c8] sm:$0xff]
        %v382 = vld [vmem:[#allocation5 + $0x1d0] sm:$0xff]
        %v383 = vld [vmem:[#allocation5 + $0x1d8] sm:$0xff]
        %v384 = vld [vmem:[#allocation5 + $0x1e0] sm:$0xff]
        %v385 = vld [vmem:[#allocation5 + $0x1e8] sm:$0xff]
        %v386 = vld [vmem:[#allocation5 + $0x1f0] sm:$0xff]
        %v387 = vld [vmem:[#allocation5 + $0x1f8] sm:$0xff]
        %v392 = vlaneseq
        %v393 = vshrl.u32 %v392, 7
        %v394 = vsub.s32 0, %v393
        %v395 = vrot.slane %v320, %v394
        %v396 = vlaneseq
        %v397 = vshrl.u32 %v396, 7
        %v398 = vsub.s32 1, %v397
        %v399 = vrot.slane %v320, %v398
        %v400 = vlaneseq
        %v401 = vshrl.u32 %v400, 7
        %v402 = vsub.s32 2, %v401
        %v403 = vrot.slane %v320, %v402
        %v404 = vlaneseq
        %v405 = vshrl.u32 %v404, 7
        %v406 = vsub.s32 3, %v405
        %v407 = vrot.slane %v320, %v406
        %v408 = vlaneseq
        %v409 = vshrl.u32 %v408, 7
        %v410 = vsub.s32 4, %v409
        %v411 = vrot.slane %v320, %v410
        %v412 = vlaneseq
        %v413 = vshrl.u32 %v412, 7
        %v414 = vsub.s32 5, %v413
        %v415 = vrot.slane %v320, %v414
        %v416 = vlaneseq
        %v417 = vshrl.u32 %v416, 7
        %v418 = vsub.s32 6, %v417
        %v419 = vrot.slane %v320, %v418
        %v420 = vlaneseq
        %v421 = vshrl.u32 %v420, 7
        %v422 = vsub.s32 7, %v421
        %v423 = vrot.slane %v320, %v422
        %v424 = vlaneseq
        %v425 = vshrl.u32 %v424, 7
        %v426 = vsub.s32 0, %v425
        %v427 = vrot.slane %v321, %v426
        %v428 = vlaneseq
        %v429 = vshrl.u32 %v428, 7
        %v430 = vsub.s32 1, %v429
        %v431 = vrot.slane %v321, %v430
        %v432 = vlaneseq
        %v433 = vshrl.u32 %v432, 7
        %v434 = vsub.s32 2, %v433
        %v435 = vrot.slane %v321, %v434
        %v436 = vlaneseq
        %v437 = vshrl.u32 %v436, 7
        %v438 = vsub.s32 3, %v437
        %v439 = vrot.slane %v321, %v438
        %v440 = vlaneseq
        %v441 = vshrl.u32 %v440, 7
        %v442 = vsub.s32 4, %v441
        %v443 = vrot.slane %v321, %v442
        %v444 = vlaneseq
        %v445 = vshrl.u32 %v444, 7
        %v446 = vsub.s32 5, %v445
        %v447 = vrot.slane %v321, %v446
        %v448 = vlaneseq
        %v449 = vshrl.u32 %v448, 7
        %v450 = vsub.s32 6, %v449
        %v451 = vrot.slane %v321, %v450
        %v452 = vlaneseq
        %v453 = vshrl.u32 %v452, 7
        %v454 = vsub.s32 7, %v453
        %v455 = vrot.slane %v321, %v454
        %v456 = vlaneseq
        %v457 = vshrl.u32 %v456, 7
        %v458 = vsub.s32 0, %v457
        %v459 = vrot.slane %v322, %v458
        %v460 = vlaneseq
        %v461 = vshrl.u32 %v460, 7
        %v462 = vsub.s32 1, %v461
        %v463 = vrot.slane %v322, %v462
        %v464 = vlaneseq
        %v465 = vshrl.u32 %v464, 7
        %v466 = vsub.s32 2, %v465
        %v467 = vrot.slane %v322, %v466
        %v468 = vlaneseq
        %v469 = vshrl.u32 %v468, 7
        %v470 = vsub.s32 3, %v469
        %v471 = vrot.slane %v322, %v470
        %v472 = vlaneseq
        %v473 = vshrl.u32 %v472, 7
        %v474 = vsub.s32 4, %v473
        %v475 = vrot.slane %v322, %v474
        %v476 = vlaneseq
        %v477 = vshrl.u32 %v476, 7
        %v478 = vsub.s32 5, %v477
        %v479 = vrot.slane %v322, %v478
        %v480 = vlaneseq
        %v481 = vshrl.u32 %v480, 7
        %v482 = vsub.s32 6, %v481
        %v483 = vrot.slane %v322, %v482
        %v484 = vlaneseq
        %v485 = vshrl.u32 %v484, 7
        %v486 = vsub.s32 7, %v485
        %v487 = vrot.slane %v322, %v486
        %v488 = vlaneseq
        %v489 = vshrl.u32 %v488, 7
        %v490 = vsub.s32 0, %v489
        %v491 = vrot.slane %v323, %v490
        %v492 = vlaneseq
        %v493 = vshrl.u32 %v492, 7
        %v494 = vsub.s32 1, %v493
        %v495 = vrot.slane %v323, %v494
        %v496 = vlaneseq
        %v497 = vshrl.u32 %v496, 7
        %v498 = vsub.s32 2, %v497
        %v499 = vrot.slane %v323, %v498
        %v500 = vlaneseq
        %v501 = vshrl.u32 %v500, 7
        %v502 = vsub.s32 3, %v501
        %v503 = vrot.slane %v323, %v502
        %v504 = vlaneseq
        %v505 = vshrl.u32 %v504, 7
        %v506 = vsub.s32 4, %v505
        %v507 = vrot.slane %v323, %v506
        %v508 = vlaneseq
        %v509 = vshrl.u32 %v508, 7
        %v510 = vsub.s32 5, %v509
        %v511 = vrot.slane %v323, %v510
        %v512 = vlaneseq
        %v513 = vshrl.u32 %v512, 7
        %v514 = vsub.s32 6, %v513
        %v515 = vrot.slane %v323, %v514
        %v516 = vlaneseq
        %v517 = vshrl.u32 %v516, 7
        %v518 = vsub.s32 7, %v517
        %v519 = vrot.slane %v323, %v518
        %v552 = vmul.f32 %v324, %v395
        %v553 = vmul.f32 %v325, %v399
        %v554 = vmul.f32 %v326, %v403
        %v555 = vmul.f32 %v327, %v407
        %v556 = vmul.f32 %v328, %v411
        %v557 = vmul.f32 %v329, %v415
        %v558 = vmul.f32 %v330, %v419
        %v559 = vmul.f32 %v331, %v423
        %v560 = vmul.f32 %v332, %v427
        %v561 = vmul.f32 %v333, %v431
        %v562 = vmul.f32 %v334, %v435
        %v563 = vmul.f32 %v335, %v439
        %v564 = vmul.f32 %v336, %v443
        %v565 = vmul.f32 %v337, %v447
        %v566 = vmul.f32 %v338, %v451
        %v567 = vmul.f32 %v339, %v455
        %v568 = vmul.f32 %v340, %v459
        %v569 = vmul.f32 %v341, %v463
        %v570 = vmul.f32 %v342, %v467
        %v571 = vmul.f32 %v343, %v471
        %v572 = vmul.f32 %v344, %v475
        %v573 = vmul.f32 %v345, %v479
        %v574 = vmul.f32 %v346, %v483
        %v575 = vmul.f32 %v347, %v487
        %v576 = vmul.f32 %v348, %v491
        %v577 = vmul.f32 %v349, %v495
        %v578 = vmul.f32 %v350, %v499
        %v579 = vmul.f32 %v351, %v503
        %v580 = vmul.f32 %v352, %v507
        %v581 = vmul.f32 %v353, %v511
        %v582 = vmul.f32 %v354, %v515
        %v583 = vmul.f32 %v355, %v519
        %v584 = vmul.f32 %v356, %v395
        %v585 = vmul.f32 %v357, %v399
        %v586 = vmul.f32 %v358, %v403
        %v587 = vmul.f32 %v359, %v407
        %v588 = vmul.f32 %v360, %v411
        %v589 = vmul.f32 %v361, %v415
        %v590 = vmul.f32 %v362, %v419
        %v591 = vmul.f32 %v363, %v423
        %v592 = vmul.f32 %v364, %v427
        %v593 = vmul.f32 %v365, %v431
        %v594 = vmul.f32 %v366, %v435
        %v595 = vmul.f32 %v367, %v439
        %v596 = vmul.f32 %v368, %v443
        %v597 = vmul.f32 %v369, %v447
        %v598 = vmul.f32 %v370, %v451
        %v599 = vmul.f32 %v371, %v455
        %v600 = vmul.f32 %v372, %v459
        %v601 = vmul.f32 %v373, %v463
        %v602 = vmul.f32 %v374, %v467
        %v603 = vmul.f32 %v375, %v471
        %v604 = vmul.f32 %v376, %v475
        %v605 = vmul.f32 %v377, %v479
        %v606 = vmul.f32 %v378, %v483
        %v607 = vmul.f32 %v379, %v487
        %v608 = vmul.f32 %v380, %v491
        %v609 = vmul.f32 %v381, %v495
        %v610 = vmul.f32 %v382, %v499
        %v611 = vmul.f32 %v383, %v503
        %v612 = vmul.f32 %v384, %v507
        %v613 = vmul.f32 %v385, %v511
        %v614 = vmul.f32 %v386, %v515
        %v615 = vmul.f32 %v387, %v519
        %v616 = vld [vmem:[#allocation7] sm:$0xff]
        %v617 = vld [vmem:[#allocation7 + $0x8] sm:$0xff]
        %v618 = vld [vmem:[#allocation7 + $0x10] sm:$0xff]
        %v619 = vld [vmem:[#allocation7 + $0x18] sm:$0xff]
        %v620 = vld [vmem:[#allocation7 + $0x20] sm:$0xff]
        %v621 = vld [vmem:[#allocation7 + $0x28] sm:$0xff]
        %v622 = vld [vmem:[#allocation7 + $0x30] sm:$0xff]
        %v623 = vld [vmem:[#allocation7 + $0x38] sm:$0xff]
        %v624 = vld [vmem:[#allocation7 + $0x40] sm:$0xff]
        %v625 = vld [vmem:[#allocation7 + $0x48] sm:$0xff]
        %v626 = vld [vmem:[#allocation7 + $0x50] sm:$0xff]
        %v627 = vld [vmem:[#allocation7 + $0x58] sm:$0xff]
        %v628 = vld [vmem:[#allocation7 + $0x60] sm:$0xff]
        %v629 = vld [vmem:[#allocation7 + $0x68] sm:$0xff]
        %v630 = vld [vmem:[#allocation7 + $0x70] sm:$0xff]
        %v631 = vld [vmem:[#allocation7 + $0x78] sm:$0xff]
        %v632 = vld [vmem:[#allocation7 + $0x80] sm:$0xff]
        %v633 = vld [vmem:[#allocation7 + $0x88] sm:$0xff]
        %v634 = vld [vmem:[#allocation7 + $0x90] sm:$0xff]
        %v635 = vld [vmem:[#allocation7 + $0x98] sm:$0xff]
        %v636 = vld [vmem:[#allocation7 + $0xa0] sm:$0xff]
        %v637 = vld [vmem:[#allocation7 + $0xa8] sm:$0xff]
        %v638 = vld [vmem:[#allocation7 + $0xb0] sm:$0xff]
        %v639 = vld [vmem:[#allocation7 + $0xb8] sm:$0xff]
        %v640 = vld [vmem:[#allocation7 + $0xc0] sm:$0xff]
        %v641 = vld [vmem:[#allocation7 + $0xc8] sm:$0xff]
        %v642 = vld [vmem:[#allocation7 + $0xd0] sm:$0xff]
        %v643 = vld [vmem:[#allocation7 + $0xd8] sm:$0xff]
        %v644 = vld [vmem:[#allocation7 + $0xe0] sm:$0xff]
        %v645 = vld [vmem:[#allocation7 + $0xe8] sm:$0xff]
        %v646 = vld [vmem:[#allocation7 + $0xf0] sm:$0xff]
        %v647 = vld [vmem:[#allocation7 + $0xf8] sm:$0xff]
        %v648 = vld [vmem:[#allocation7 + $0x100] sm:$0xff]
        %v649 = vld [vmem:[#allocation7 + $0x108] sm:$0xff]
        %v650 = vld [vmem:[#allocation7 + $0x110] sm:$0xff]
        %v651 = vld [vmem:[#allocation7 + $0x118] sm:$0xff]
        %v652 = vld [vmem:[#allocation7 + $0x120] sm:$0xff]
        %v653 = vld [vmem:[#allocation7 + $0x128] sm:$0xff]
        %v654 = vld [vmem:[#allocation7 + $0x130] sm:$0xff]
        %v655 = vld [vmem:[#allocation7 + $0x138] sm:$0xff]
        %v656 = vld [vmem:[#allocation7 + $0x140] sm:$0xff]
        %v657 = vld [vmem:[#allocation7 + $0x148] sm:$0xff]
        %v658 = vld [vmem:[#allocation7 + $0x150] sm:$0xff]
        %v659 = vld [vmem:[#allocation7 + $0x158] sm:$0xff]
        %v660 = vld [vmem:[#allocation7 + $0x160] sm:$0xff]
        %v661 = vld [vmem:[#allocation7 + $0x168] sm:$0xff]
        %v662 = vld [vmem:[#allocation7 + $0x170] sm:$0xff]
        %v663 = vld [vmem:[#allocation7 + $0x178] sm:$0xff]
        %v664 = vld [vmem:[#allocation7 + $0x180] sm:$0xff]
        %v665 = vld [vmem:[#allocation7 + $0x188] sm:$0xff]
        %v666 = vld [vmem:[#allocation7 + $0x190] sm:$0xff]
        %v667 = vld [vmem:[#allocation7 + $0x198] sm:$0xff]
        %v668 = vld [vmem:[#allocation7 + $0x1a0] sm:$0xff]
        %v669 = vld [vmem:[#allocation7 + $0x1a8] sm:$0xff]
        %v670 = vld [vmem:[#allocation7 + $0x1b0] sm:$0xff]
        %v671 = vld [vmem:[#allocation7 + $0x1b8] sm:$0xff]
        %v672 = vld [vmem:[#allocation7 + $0x1c0] sm:$0xff]
        %v673 = vld [vmem:[#allocation7 + $0x1c8] sm:$0xff]
        %v674 = vld [vmem:[#allocation7 + $0x1d0] sm:$0xff]
        %v675 = vld [vmem:[#allocation7 + $0x1d8] sm:$0xff]
        %v676 = vld [vmem:[#allocation7 + $0x1e0] sm:$0xff]
        %v677 = vld [vmem:[#allocation7 + $0x1e8] sm:$0xff]
        %v678 = vld [vmem:[#allocation7 + $0x1f0] sm:$0xff]
        %v679 = vld [vmem:[#allocation7 + $0x1f8] sm:$0xff]
        %v680 = vadd.f32 %v552, %v616
        %v681 = vadd.f32 %v553, %v617
        %v682 = vadd.f32 %v554, %v618
        %v683 = vadd.f32 %v555, %v619
        %v684 = vadd.f32 %v556, %v620
        %v685 = vadd.f32 %v557, %v621
        %v686 = vadd.f32 %v558, %v622
        %v687 = vadd.f32 %v559, %v623
        %v688 = vadd.f32 %v560, %v624
        %v689 = vadd.f32 %v561, %v625
        %v690 = vadd.f32 %v562, %v626
        %v691 = vadd.f32 %v563, %v627
        %v692 = vadd.f32 %v564, %v628
        %v693 = vadd.f32 %v565, %v629
        %v694 = vadd.f32 %v566, %v630
        %v695 = vadd.f32 %v567, %v631
        %v696 = vadd.f32 %v568, %v632
        %v697 = vadd.f32 %v569, %v633
        %v698 = vadd.f32 %v570, %v634
        %v699 = vadd.f32 %v571, %v635
        %v700 = vadd.f32 %v572, %v636
        %v701 = vadd.f32 %v573, %v637
        %v702 = vadd.f32 %v574, %v638
        %v703 = vadd.f32 %v575, %v639
        %v704 = vadd.f32 %v576, %v640
        %v705 = vadd.f32 %v577, %v641
        %v706 = vadd.f32 %v578, %v642
        %v707 = vadd.f32 %v579, %v643
        %v708 = vadd.f32 %v580, %v644
        %v709 = vadd.f32 %v581, %v645
        %v710 = vadd.f32 %v582, %v646
        %v711 = vadd.f32 %v583, %v647
        %v712 = vadd.f32 %v584, %v648
        %v713 = vadd.f32 %v585, %v649
        %v714 = vadd.f32 %v586, %v650
        %v715 = vadd.f32 %v587, %v651
        %v716 = vadd.f32 %v588, %v652
        %v717 = vadd.f32 %v589, %v653
        %v718 = vadd.f32 %v590, %v654
        %v719 = vadd.f32 %v591, %v655
        %v720 = vadd.f32 %v592, %v656
        %v721 = vadd.f32 %v593, %v657
        %v722 = vadd.f32 %v594, %v658
        %v723 = vadd.f32 %v595, %v659
        %v724 = vadd.f32 %v596, %v660
        %v725 = vadd.f32 %v597, %v661
        %v726 = vadd.f32 %v598, %v662
        %v727 = vadd.f32 %v599, %v663
        %v728 = vadd.f32 %v600, %v664
        %v729 = vadd.f32 %v601, %v665
        %v730 = vadd.f32 %v602, %v666
        %v731 = vadd.f32 %v603, %v667
        %v732 = vadd.f32 %v604, %v668
        %v733 = vadd.f32 %v605, %v669
        %v734 = vadd.f32 %v606, %v670
        %v735 = vadd.f32 %v607, %v671
        %v736 = vadd.f32 %v608, %v672
        %v737 = vadd.f32 %v609, %v673
        %v738 = vadd.f32 %v610, %v674
        %v739 = vadd.f32 %v611, %v675
        %v740 = vadd.f32 %v612, %v676
        %v741 = vadd.f32 %v613, %v677
        %v742 = vadd.f32 %v614, %v678
        %v743 = vadd.f32 %v615, %v679
        %v744 = vmax.f32 %v680, 0.0
        %v745 = vmax.f32 %v681, 0.0
        %v746 = vmax.f32 %v682, 0.0
        %v747 = vmax.f32 %v683, 0.0
        %v748 = vmax.f32 %v684, 0.0
        %v749 = vmax.f32 %v685, 0.0
        %v750 = vmax.f32 %v686, 0.0
        %v751 = vmax.f32 %v687, 0.0
        %v752 = vmax.f32 %v688, 0.0
        %v753 = vmax.f32 %v689, 0.0
        %v754 = vmax.f32 %v690, 0.0
        %v755 = vmax.f32 %v691, 0.0
        %v756 = vmax.f32 %v692, 0.0
        %v757 = vmax.f32 %v693, 0.0
        %v758 = vmax.f32 %v694, 0.0
        %v759 = vmax.f32 %v695, 0.0
        %v760 = vmax.f32 %v696, 0.0
        %v761 = vmax.f32 %v697, 0.0
        %v762 = vmax.f32 %v698, 0.0
        %v763 = vmax.f32 %v699, 0.0
        %v764 = vmax.f32 %v700, 0.0
        %v765 = vmax.f32 %v701, 0.0
        %v766 = vmax.f32 %v702, 0.0
        %v767 = vmax.f32 %v703, 0.0
        %v768 = vmax.f32 %v704, 0.0
        %v769 = vmax.f32 %v705, 0.0
        %v770 = vmax.f32 %v706, 0.0
        %v771 = vmax.f32 %v707, 0.0
        %v772 = vmax.f32 %v708, 0.0
        %v773 = vmax.f32 %v709, 0.0
        %v774 = vmax.f32 %v710, 0.0
        %v775 = vmax.f32 %v711, 0.0
        %v776 = vmax.f32 %v712, 0.0
        %v777 = vmax.f32 %v713, 0.0
        %v778 = vmax.f32 %v714, 0.0
        %v779 = vmax.f32 %v715, 0.0
        %v780 = vmax.f32 %v716, 0.0
        %v781 = vmax.f32 %v717, 0.0
        %v782 = vmax.f32 %v718, 0.0
        %v783 = vmax.f32 %v719, 0.0
        %v784 = vmax.f32 %v720, 0.0
        %v785 = vmax.f32 %v721, 0.0
        %v786 = vmax.f32 %v722, 0.0
        %v787 = vmax.f32 %v723, 0.0
        %v788 = vmax.f32 %v724, 0.0
        %v789 = vmax.f32 %v725, 0.0
        %v790 = vmax.f32 %v726, 0.0
        %v791 = vmax.f32 %v727, 0.0
        %v792 = vmax.f32 %v728, 0.0
        %v793 = vmax.f32 %v729, 0.0
        %v794 = vmax.f32 %v730, 0.0
        %v795 = vmax.f32 %v731, 0.0
        %v796 = vmax.f32 %v732, 0.0
        %v797 = vmax.f32 %v733, 0.0
        %v798 = vmax.f32 %v734, 0.0
        %v799 = vmax.f32 %v735, 0.0
        %v800 = vmax.f32 %v736, 0.0
        %v801 = vmax.f32 %v737, 0.0
        %v802 = vmax.f32 %v738, 0.0
        %v803 = vmax.f32 %v739, 0.0
        %v804 = vmax.f32 %v740, 0.0
        %v805 = vmax.f32 %v741, 0.0
        %v806 = vmax.f32 %v742, 0.0
        %v807 = vmax.f32 %v743, 0.0
        %v808 = vld [vmem:[#allocation8] sm:$0xff]
        %v809 = vld [vmem:[#allocation8 + $0x8] sm:$0xff]
        %v810 = vld [vmem:[#allocation10] sm:$0xff]
        %v811 = vld [vmem:[#allocation10 + $0x8] sm:$0xff]
        %v812 = vld [vmem:[#allocation10 + $0x10] sm:$0xff]
        %v813 = vld [vmem:[#allocation10 + $0x18] sm:$0xff]
        %v814 = vld [vmem:[#allocation10 + $0x20] sm:$0xff]
        %v815 = vld [vmem:[#allocation10 + $0x28] sm:$0xff]
        %v816 = vld [vmem:[#allocation10 + $0x30] sm:$0xff]
        %v817 = vld [vmem:[#allocation10 + $0x38] sm:$0xff]
        %v818 = vld [vmem:[#allocation10 + $0x40] sm:$0xff]
        %v819 = vld [vmem:[#allocation10 + $0x48] sm:$0xff]
        %v820 = vld [vmem:[#allocation10 + $0x50] sm:$0xff]
        %v821 = vld [vmem:[#allocation10 + $0x58] sm:$0xff]
        %v822 = vld [vmem:[#allocation10 + $0x60] sm:$0xff]
        %v823 = vld [vmem:[#allocation10 + $0x68] sm:$0xff]
        %v824 = vld [vmem:[#allocation10 + $0x70] sm:$0xff]
        %v825 = vld [vmem:[#allocation10 + $0x78] sm:$0xff]
        %v826 = vld [vmem:[#allocation10 + $0x80] sm:$0xff]
        %v827 = vld [vmem:[#allocation10 + $0x88] sm:$0xff]
        %v828 = vld [vmem:[#allocation10 + $0x90] sm:$0xff]
        %v829 = vld [vmem:[#allocation10 + $0x98] sm:$0xff]
        %v830 = vld [vmem:[#allocation10 + $0xa0] sm:$0xff]
        %v831 = vld [vmem:[#allocation10 + $0xa8] sm:$0xff]
        %v832 = vld [vmem:[#allocation10 + $0xb0] sm:$0xff]
        %v833 = vld [vmem:[#allocation10 + $0xb8] sm:$0xff]
        %v834 = vld [vmem:[#allocation10 + $0xc0] sm:$0xff]
        %v835 = vld [vmem:[#allocation10 + $0xc8] sm:$0xff]
        %v836 = vld [vmem:[#allocation10 + $0xd0] sm:$0xff]
        %v837 = vld [vmem:[#allocation10 + $0xd8] sm:$0xff]
        %v838 = vld [vmem:[#allocation10 + $0xe0] sm:$0xff]
        %v839 = vld [vmem:[#allocation10 + $0xe8] sm:$0xff]
        %v840 = vld [vmem:[#allocation10 + $0xf0] sm:$0xff]
        %v841 = vld [vmem:[#allocation10 + $0xf8] sm:$0xff]
        %v842 = vld [vmem:[#allocation10 + $0x100] sm:$0xff]
        %v843 = vld [vmem:[#allocation10 + $0x108] sm:$0xff]
        %v844 = vld [vmem:[#allocation10 + $0x110] sm:$0xff]
        %v845 = vld [vmem:[#allocation10 + $0x118] sm:$0xff]
        %v846 = vld [vmem:[#allocation10 + $0x120] sm:$0xff]
        %v847 = vld [vmem:[#allocation10 + $0x128] sm:$0xff]
        %v848 = vld [vmem:[#allocation10 + $0x130] sm:$0xff]
        %v849 = vld [vmem:[#allocation10 + $0x138] sm:$0xff]
        %v850 = vld [vmem:[#allocation10 + $0x140] sm:$0xff]
        %v851 = vld [vmem:[#allocation10 + $0x148] sm:$0xff]
        %v852 = vld [vmem:[#allocation10 + $0x150] sm:$0xff]
        %v853 = vld [vmem:[#allocation10 + $0x158] sm:$0xff]
        %v854 = vld [vmem:[#allocation10 + $0x160] sm:$0xff]
        %v855 = vld [vmem:[#allocation10 + $0x168] sm:$0xff]
        %v856 = vld [vmem:[#allocation10 + $0x170] sm:$0xff]
        %v857 = vld [vmem:[#allocation10 + $0x178] sm:$0xff]
        %v858 = vld [vmem:[#allocation10 + $0x180] sm:$0xff]
        %v859 = vld [vmem:[#allocation10 + $0x188] sm:$0xff]
        %v860 = vld [vmem:[#allocation10 + $0x190] sm:$0xff]
        %v861 = vld [vmem:[#allocation10 + $0x198] sm:$0xff]
        %v862 = vld [vmem:[#allocation10 + $0x1a0] sm:$0xff]
        %v863 = vld [vmem:[#allocation10 + $0x1a8] sm:$0xff]
        %v864 = vld [vmem:[#allocation10 + $0x1b0] sm:$0xff]
        %v865 = vld [vmem:[#allocation10 + $0x1b8] sm:$0xff]
        %v866 = vld [vmem:[#allocation10 + $0x1c0] sm:$0xff]
        %v867 = vld [vmem:[#allocation10 + $0x1c8] sm:$0xff]
        %v868 = vld [vmem:[#allocation10 + $0x1d0] sm:$0xff]
        %v869 = vld [vmem:[#allocation10 + $0x1d8] sm:$0xff]
        %v870 = vld [vmem:[#allocation10 + $0x1e0] sm:$0xff]
        %v871 = vld [vmem:[#allocation10 + $0x1e8] sm:$0xff]
        %v872 = vld [vmem:[#allocation10 + $0x1f0] sm:$0xff]
        %v873 = vld [vmem:[#allocation10 + $0x1f8] sm:$0xff]
        %vm874 = vcmask 130048
        %v876 = vsel %vm874, %v808, 0
        %v879 = vsel %vm874, %v809, 0
        %881 = vmatprep.subr.mxu0 0.0
        %882 = vmatpush1.msra.mxu0 0.0
        %883 = vmatprep.subr.mxu0 0.0
        %884 = vmatpush1.msra.mxu0 0.0
        %885 = vmatprep.subr.mxu0 0.0
        %886 = vmatpush1.msra.mxu0 0.0
        %887 = vmatprep.subr.mxu0 0.0
        %888 = vmatpush1.msra.mxu0 0.0
        %889 = vmatprep.subr.mxu0 0.0
        %890 = vmatpush1.msra.mxu0 0.0
        %891 = vmatprep.subr.mxu0 0.0
        %892 = vmatpush1.msra.mxu0 0.0
        %893 = vmatprep.subr.mxu0 0.0
        %894 = vmatpush1.msra.mxu0 0.0
        %895 = vmatprep.subr.mxu0 0.0
        %896 = vmatpush1.msra.mxu0 0.0
        %897 = vmatprep.subr.mxu0 0.0
        %898 = vmatpush1.msra.mxu0 0.0
        %899 = vmatprep.subr.mxu0 0.0
        %900 = vmatpush1.msra.mxu0 0.0
        %901 = vmatprep.subr.mxu0 0.0
        %902 = vmatpush1.msra.mxu0 0.0
        %903 = vmatprep.subr.mxu0 0.0
        %904 = vmatpush1.msra.mxu0 0.0
        %905 = vmatprep.subr.mxu0 0.0
        %906 = vmatpush1.msra.mxu0 0.0
        %907 = vmatprep.subr.mxu0 0.0
        %908 = vmatpush1.msra.mxu0 0.0
        %909 = vmatprep.subr.mxu0 %v777
        %910 = vmatpush1.msra.mxu0 %v776
        %911 = vmatprep.subr.mxu0 %v745
        %912 = vmatpush1.msra.mxu0 %v744
        %913 = vmatprep.subr.mxu0 0.0
        %914 = vmatpush2.msra.mxu0 0.0
        %915 = vmatprep.subr.mxu0 0.0
        %916 = vmatpush2.msra.mxu0 0.0
        %917 = vmatprep.subr.mxu0 0.0
        %918 = vmatpush2.msra.mxu0 0.0
        %919 = vmatprep.subr.mxu0 0.0
        %920 = vmatpush2.msra.mxu0 0.0
        %921 = vmatprep.subr.mxu0 0.0
        %922 = vmatpush2.msra.mxu0 0.0
        %923 = vmatprep.subr.mxu0 0.0
        %924 = vmatpush2.msra.mxu0 0.0
        %925 = vmatprep.subr.mxu0 0.0
        %926 = vmatpush2.msra.mxu0 0.0
        %927 = vmatprep.subr.mxu0 0.0
        %928 = vmatpush2.msra.mxu0 0.0
        %929 = vmatprep.subr.mxu0 0.0
        %930 = vmatpush2.msra.mxu0 0.0
        %931 = vmatprep.subr.mxu0 0.0
        %932 = vmatpush2.msra.mxu0 0.0
        %933 = vmatprep.subr.mxu0 0.0
        %934 = vmatpush2.msra.mxu0 0.0
        %935 = vmatprep.subr.mxu0 0.0
        %936 = vmatpush2.msra.mxu0 0.0
        %937 = vmatprep.subr.mxu0 0.0
        %938 = vmatpush2.msra.mxu0 0.0
        %939 = vmatprep.subr.mxu0 0.0
        %940 = vmatpush2.msra.mxu0 0.0
        %941 = vmatprep.subr.mxu0 0.0
        %942 = vmatpush2.msra.mxu0 0.0
        %943 = vmatprep.subr.mxu0 0.0
        %944 = vmatpush2.msra.mxu0 0.0
        %945 = vmatprep.mubr.f32.mxu0 0.0
        %946 = vmatmul.mubr.f32.gmra.mxu0 %v876
        %v947 = vpop.f32.mrf.mxu0
        %v948 = vadd.f32 %v810, %v947
        %v949 = vpop.f32.mrf.mxu0
        %v950 = vadd.f32 %v811, %v949
        %951 = vmatprep.mubr.f32.mxu0 0.0
        %952 = vmatmul.mubr.f32.gmra.mxu0 %v879
        %v953 = vpop.f32.mrf.mxu0
        %v954 = vadd.f32 %v842, %v953
        %v955 = vpop.f32.mrf.mxu0
        %v956 = vadd.f32 %v843, %v955
        %957 = vdwg.mxu0
        %958 = vmatprep.subr.mxu0 0.0
        %959 = vmatpush1.msra.mxu0 0.0
        %960 = vmatprep.subr.mxu0 0.0
        %961 = vmatpush1.msra.mxu0 0.0
        %962 = vmatprep.subr.mxu0 0.0
        %963 = vmatpush1.msra.mxu0 0.0
        %964 = vmatprep.subr.mxu0 0.0
        %965 = vmatpush1.msra.mxu0 0.0
        %966 = vmatprep.subr.mxu0 0.0
        %967 = vmatpush1.msra.mxu0 0.0
        %968 = vmatprep.subr.mxu0 0.0
        %969 = vmatpush1.msra.mxu0 0.0
        %970 = vmatprep.subr.mxu0 0.0
        %971 = vmatpush1.msra.mxu0 0.0
        %972 = vmatprep.subr.mxu0 0.0
        %973 = vmatpush1.msra.mxu0 0.0
        %974 = vmatprep.subr.mxu0 0.0
        %975 = vmatpush1.msra.mxu0 0.0
        %976 = vmatprep.subr.mxu0 0.0
        %977 = vmatpush1.msra.mxu0 0.0
        %978 = vmatprep.subr.mxu0 0.0
        %979 = vmatpush1.msra.mxu0 0.0
        %980 = vmatprep.subr.mxu0 0.0
        %981 = vmatpush1.msra.mxu0 0.0
        %982 = vmatprep.subr.mxu0 0.0
        %983 = vmatpush1.msra.mxu0 0.0
        %984 = vmatprep.subr.mxu0 0.0
        %985 = vmatpush1.msra.mxu0 0.0
        %986 = vmatprep.subr.mxu0 %v779
        %987 = vmatpush1.msra.mxu0 %v778
        %988 = vmatprep.subr.mxu0 %v747
        %989 = vmatpush1.msra.mxu0 %v746
        %990 = vmatprep.subr.mxu0 0.0
        %991 = vmatpush2.msra.mxu0 0.0
        %992 = vmatprep.subr.mxu0 0.0
        %993 = vmatpush2.msra.mxu0 0.0
        %994 = vmatprep.subr.mxu0 0.0
        %995 = vmatpush2.msra.mxu0 0.0
        %996 = vmatprep.subr.mxu0 0.0
        %997 = vmatpush2.msra.mxu0 0.0
        %998 = vmatprep.subr.mxu0 0.0
        %999 = vmatpush2.msra.mxu0 0.0
        %1000 = vmatprep.subr.mxu0 0.0
        %1001 = vmatpush2.msra.mxu0 0.0
        %1002 = vmatprep.subr.mxu0 0.0
        %1003 = vmatpush2.msra.mxu0 0.0
        %1004 = vmatprep.subr.mxu0 0.0
        %1005 = vmatpush2.msra.mxu0 0.0
        %1006 = vmatprep.subr.mxu0 0.0
        %1007 = vmatpush2.msra.mxu0 0.0
        %1008 = vmatprep.subr.mxu0 0.0
        %1009 = vmatpush2.msra.mxu0 0.0
        %1010 = vmatprep.subr.mxu0 0.0
        %1011 = vmatpush2.msra.mxu0 0.0
        %1012 = vmatprep.subr.mxu0 0.0
        %1013 = vmatpush2.msra.mxu0 0.0
        %1014 = vmatprep.subr.mxu0 0.0
        %1015 = vmatpush2.msra.mxu0 0.0
        %1016 = vmatprep.subr.mxu0 0.0
        %1017 = vmatpush2.msra.mxu0 0.0
        %1018 = vmatprep.subr.mxu0 0.0
        %1019 = vmatpush2.msra.mxu0 0.0
        %1020 = vmatprep.subr.mxu0 0.0
        %1021 = vmatpush2.msra.mxu0 0.0
        %1022 = vmatprep.mubr.f32.mxu0 0.0
        %1023 = vmatmul.mubr.f32.gmra.mxu0 %v876
        %v1024 = vpop.f32.mrf.mxu0
        %v1025 = vadd.f32 %v812, %v1024
        %v1026 = vpop.f32.mrf.mxu0
        %v1027 = vadd.f32 %v813, %v1026
        %1028 = vmatprep.mubr.f32.mxu0 0.0
        %1029 = vmatmul.mubr.f32.gmra.mxu0 %v879
        %v1030 = vpop.f32.mrf.mxu0
        %v1031 = vadd.f32 %v844, %v1030
        %v1032 = vpop.f32.mrf.mxu0
        %v1033 = vadd.f32 %v845, %v1032
        %1034 = vdwg.mxu0
        %1035 = vmatprep.subr.mxu0 0.0
        %1036 = vmatpush1.msra.mxu0 0.0
        %1037 = vmatprep.subr.mxu0 0.0
        %1038 = vmatpush1.msra.mxu0 0.0
        %1039 = vmatprep.subr.mxu0 0.0
        %1040 = vmatpush1.msra.mxu0 0.0
        %1041 = vmatprep.subr.mxu0 0.0
        %1042 = vmatpush1.msra.mxu0 0.0
        %1043 = vmatprep.subr.mxu0 0.0
        %1044 = vmatpush1.msra.mxu0 0.0
        %1045 = vmatprep.subr.mxu0 0.0
        %1046 = vmatpush1.msra.mxu0 0.0
        %1047 = vmatprep.subr.mxu0 0.0
        %1048 = vmatpush1.msra.mxu0 0.0
        %1049 = vmatprep.subr.mxu0 0.0
        %1050 = vmatpush1.msra.mxu0 0.0
        %1051 = vmatprep.subr.mxu0 0.0
        %1052 = vmatpush1.msra.mxu0 0.0
        %1053 = vmatprep.subr.mxu0 0.0
        %1054 = vmatpush1.msra.mxu0 0.0
        %1055 = vmatprep.subr.mxu0 0.0
        %1056 = vmatpush1.msra.mxu0 0.0
        %1057 = vmatprep.subr.mxu0 0.0
        %1058 = vmatpush1.msra.mxu0 0.0
        %1059 = vmatprep.subr.mxu0 0.0
        %1060 = vmatpush1.msra.mxu0 0.0
        %1061 = vmatprep.subr.mxu0 0.0
        %1062 = vmatpush1.msra.mxu0 0.0
        %1063 = vmatprep.subr.mxu0 %v781
        %1064 = vmatpush1.msra.mxu0 %v780
        %1065 = vmatprep.subr.mxu0 %v749
        %1066 = vmatpush1.msra.mxu0 %v748
        %1067 = vmatprep.subr.mxu0 0.0
        %1068 = vmatpush2.msra.mxu0 0.0
        %1069 = vmatprep.subr.mxu0 0.0
        %1070 = vmatpush2.msra.mxu0 0.0
        %1071 = vmatprep.subr.mxu0 0.0
        %1072 = vmatpush2.msra.mxu0 0.0
        %1073 = vmatprep.subr.mxu0 0.0
        %1074 = vmatpush2.msra.mxu0 0.0
        %1075 = vmatprep.subr.mxu0 0.0
        %1076 = vmatpush2.msra.mxu0 0.0
        %1077 = vmatprep.subr.mxu0 0.0
        %1078 = vmatpush2.msra.mxu0 0.0
        %1079 = vmatprep.subr.mxu0 0.0
        %1080 = vmatpush2.msra.mxu0 0.0
        %1081 = vmatprep.subr.mxu0 0.0
        %1082 = vmatpush2.msra.mxu0 0.0
        %1083 = vmatprep.subr.mxu0 0.0
        %1084 = vmatpush2.msra.mxu0 0.0
        %1085 = vmatprep.subr.mxu0 0.0
        %1086 = vmatpush2.msra.mxu0 0.0
        %1087 = vmatprep.subr.mxu0 0.0
        %1088 = vmatpush2.msra.mxu0 0.0
        %1089 = vmatprep.subr.mxu0 0.0
        %1090 = vmatpush2.msra.mxu0 0.0
        %1091 = vmatprep.subr.mxu0 0.0
        %1092 = vmatpush2.msra.mxu0 0.0
        %1093 = vmatprep.subr.mxu0 0.0
        %1094 = vmatpush2.msra.mxu0 0.0
        %1095 = vmatprep.subr.mxu0 0.0
        %1096 = vmatpush2.msra.mxu0 0.0
        %1097 = vmatprep.subr.mxu0 0.0
        %1098 = vmatpush2.msra.mxu0 0.0
        %1099 = vmatprep.mubr.f32.mxu0 0.0
        %1100 = vmatmul.mubr.f32.gmra.mxu0 %v876
        %v1101 = vpop.f32.mrf.mxu0
        %v1102 = vadd.f32 %v814, %v1101
        %v1103 = vpop.f32.mrf.mxu0
        %v1104 = vadd.f32 %v815, %v1103
        %1105 = vmatprep.mubr.f32.mxu0 0.0
        %1106 = vmatmul.mubr.f32.gmra.mxu0 %v879
        %v1107 = vpop.f32.mrf.mxu0
        %v1108 = vadd.f32 %v846, %v1107
        %v1109 = vpop.f32.mrf.mxu0
        %v1110 = vadd.f32 %v847, %v1109
        %1111 = vdwg.mxu0
        %1112 = vmatprep.subr.mxu0 0.0
        %1113 = vmatpush1.msra.mxu0 0.0
        %1114 = vmatprep.subr.mxu0 0.0
        %1115 = vmatpush1.msra.mxu0 0.0
        %1116 = vmatprep.subr.mxu0 0.0
        %1117 = vmatpush1.msra.mxu0 0.0
        %1118 = vmatprep.subr.mxu0 0.0
        %1119 = vmatpush1.msra.mxu0 0.0
        %1120 = vmatprep.subr.mxu0 0.0
        %1121 = vmatpush1.msra.mxu0 0.0
        %1122 = vmatprep.subr.mxu0 0.0
        %1123 = vmatpush1.msra.mxu0 0.0
        %1124 = vmatprep.subr.mxu0 0.0
        %1125 = vmatpush1.msra.mxu0 0.0
        %1126 = vmatprep.subr.mxu0 0.0
        %1127 = vmatpush1.msra.mxu0 0.0
        %1128 = vmatprep.subr.mxu0 0.0
        %1129 = vmatpush1.msra.mxu0 0.0
        %1130 = vmatprep.subr.mxu0 0.0
        %1131 = vmatpush1.msra.mxu0 0.0
        %1132 = vmatprep.subr.mxu0 0.0
        %1133 = vmatpush1.msra.mxu0 0.0
        %1134 = vmatprep.subr.mxu0 0.0
        %1135 = vmatpush1.msra.mxu0 0.0
        %1136 = vmatprep.subr.mxu0 0.0
        %1137 = vmatpush1.msra.mxu0 0.0
        %1138 = vmatprep.subr.mxu0 0.0
        %1139 = vmatpush1.msra.mxu0 0.0
        %1140 = vmatprep.subr.mxu0 %v783
        %1141 = vmatpush1.msra.mxu0 %v782
        %1142 = vmatprep.subr.mxu0 %v751
        %1143 = vmatpush1.msra.mxu0 %v750
        %1144 = vmatprep.subr.mxu0 0.0
        %1145 = vmatpush2.msra.mxu0 0.0
        %1146 = vmatprep.subr.mxu0 0.0
        %1147 = vmatpush2.msra.mxu0 0.0
        %1148 = vmatprep.subr.mxu0 0.0
        %1149 = vmatpush2.msra.mxu0 0.0
        %1150 = vmatprep.subr.mxu0 0.0
        %1151 = vmatpush2.msra.mxu0 0.0
        %1152 = vmatprep.subr.mxu0 0.0
        %1153 = vmatpush2.msra.mxu0 0.0
        %1154 = vmatprep.subr.mxu0 0.0
        %1155 = vmatpush2.msra.mxu0 0.0
        %1156 = vmatprep.subr.mxu0 0.0
        %1157 = vmatpush2.msra.mxu0 0.0
        %1158 = vmatprep.subr.mxu0 0.0
        %1159 = vmatpush2.msra.mxu0 0.0
        %1160 = vmatprep.subr.mxu0 0.0
        %1161 = vmatpush2.msra.mxu0 0.0
        %1162 = vmatprep.subr.mxu0 0.0
        %1163 = vmatpush2.msra.mxu0 0.0
        %1164 = vmatprep.subr.mxu0 0.0
        %1165 = vmatpush2.msra.mxu0 0.0
        %1166 = vmatprep.subr.mxu0 0.0
        %1167 = vmatpush2.msra.mxu0 0.0
        %1168 = vmatprep.subr.mxu0 0.0
        %1169 = vmatpush2.msra.mxu0 0.0
        %1170 = vmatprep.subr.mxu0 0.0
        %1171 = vmatpush2.msra.mxu0 0.0
        %1172 = vmatprep.subr.mxu0 0.0
        %1173 = vmatpush2.msra.mxu0 0.0
        %1174 = vmatprep.subr.mxu0 0.0
        %1175 = vmatpush2.msra.mxu0 0.0
        %1176 = vmatprep.mubr.f32.mxu0 0.0
        %1177 = vmatmul.mubr.f32.gmra.mxu0 %v876
        %v1178 = vpop.f32.mrf.mxu0
        %v1179 = vadd.f32 %v816, %v1178
        %v1180 = vpop.f32.mrf.mxu0
        %v1181 = vadd.f32 %v817, %v1180
        %1182 = vmatprep.mubr.f32.mxu0 0.0
        %1183 = vmatmul.mubr.f32.gmra.mxu0 %v879
        %v1184 = vpop.f32.mrf.mxu0
        %v1185 = vadd.f32 %v848, %v1184
        %v1186 = vpop.f32.mrf.mxu0
        %v1187 = vadd.f32 %v849, %v1186
        %1188 = vdwg.mxu0
        %1189 = vmatprep.subr.mxu0 0.0
        %1190 = vmatpush1.msra.mxu0 0.0
        %1191 = vmatprep.subr.mxu0 0.0
        %1192 = vmatpush1.msra.mxu0 0.0
        %1193 = vmatprep.subr.mxu0 0.0
        %1194 = vmatpush1.msra.mxu0 0.0
        %1195 = vmatprep.subr.mxu0 0.0
        %1196 = vmatpush1.msra.mxu0 0.0
        %1197 = vmatprep.subr.mxu0 0.0
        %1198 = vmatpush1.msra.mxu0 0.0
        %1199 = vmatprep.subr.mxu0 0.0
        %1200 = vmatpush1.msra.mxu0 0.0
        %1201 = vmatprep.subr.mxu0 0.0
        %1202 = vmatpush1.msra.mxu0 0.0
        %1203 = vmatprep.subr.mxu0 0.0
        %1204 = vmatpush1.msra.mxu0 0.0
        %1205 = vmatprep.subr.mxu0 0.0
        %1206 = vmatpush1.msra.mxu0 0.0
        %1207 = vmatprep.subr.mxu0 0.0
        %1208 = vmatpush1.msra.mxu0 0.0
        %1209 = vmatprep.subr.mxu0 0.0
        %1210 = vmatpush1.msra.mxu0 0.0
        %1211 = vmatprep.subr.mxu0 0.0
        %1212 = vmatpush1.msra.mxu0 0.0
        %1213 = vmatprep.subr.mxu0 0.0
        %1214 = vmatpush1.msra.mxu0 0.0
        %1215 = vmatprep.subr.mxu0 0.0
        %1216 = vmatpush1.msra.mxu0 0.0
        %1217 = vmatprep.subr.mxu0 %v785
        %1218 = vmatpush1.msra.mxu0 %v784
        %1219 = vmatprep.subr.mxu0 %v753
        %1220 = vmatpush1.msra.mxu0 %v752
        %1221 = vmatprep.subr.mxu0 0.0
        %1222 = vmatpush2.msra.mxu0 0.0
        %1223 = vmatprep.subr.mxu0 0.0
        %1224 = vmatpush2.msra.mxu0 0.0
        %1225 = vmatprep.subr.mxu0 0.0
        %1226 = vmatpush2.msra.mxu0 0.0
        %1227 = vmatprep.subr.mxu0 0.0
        %1228 = vmatpush2.msra.mxu0 0.0
        %1229 = vmatprep.subr.mxu0 0.0
        %1230 = vmatpush2.msra.mxu0 0.0
        %1231 = vmatprep.subr.mxu0 0.0
        %1232 = vmatpush2.msra.mxu0 0.0
        %1233 = vmatprep.subr.mxu0 0.0
        %1234 = vmatpush2.msra.mxu0 0.0
        %1235 = vmatprep.subr.mxu0 0.0
        %1236 = vmatpush2.msra.mxu0 0.0
        %1237 = vmatprep.subr.mxu0 0.0
        %1238 = vmatpush2.msra.mxu0 0.0
        %1239 = vmatprep.subr.mxu0 0.0
        %1240 = vmatpush2.msra.mxu0 0.0
        %1241 = vmatprep.subr.mxu0 0.0
        %1242 = vmatpush2.msra.mxu0 0.0
        %1243 = vmatprep.subr.mxu0 0.0
        %1244 = vmatpush2.msra.mxu0 0.0
        %1245 = vmatprep.subr.mxu0 0.0
        %1246 = vmatpush2.msra.mxu0 0.0
        %1247 = vmatprep.subr.mxu0 0.0
        %1248 = vmatpush2.msra.mxu0 0.0
        %1249 = vmatprep.subr.mxu0 0.0
        %1250 = vmatpush2.msra.mxu0 0.0
        %1251 = vmatprep.subr.mxu0 0.0
        %1252 = vmatpush2.msra.mxu0 0.0
        %1253 = vmatprep.mubr.f32.mxu0 0.0
        %1254 = vmatmul.mubr.f32.gmra.mxu0 %v876
        %v1255 = vpop.f32.mrf.mxu0
        %v1256 = vadd.f32 %v818, %v1255
        %v1257 = vpop.f32.mrf.mxu0
        %v1258 = vadd.f32 %v819, %v1257
        %1259 = vmatprep.mubr.f32.mxu0 0.0
        %1260 = vmatmul.mubr.f32.gmra.mxu0 %v879
        %v1261 = vpop.f32.mrf.mxu0
        %v1262 = vadd.f32 %v850, %v1261
        %v1263 = vpop.f32.mrf.mxu0
        %v1264 = vadd.f32 %v851, %v1263
        %1265 = vdwg.mxu0
        %1266 = vmatprep.subr.mxu0 0.0
        %1267 = vmatpush1.msra.mxu0 0.0
        %1268 = vmatprep.subr.mxu0 0.0
        %1269 = vmatpush1.msra.mxu0 0.0
        %1270 = vmatprep.subr.mxu0 0.0
        %1271 = vmatpush1.msra.mxu0 0.0
        %1272 = vmatprep.subr.mxu0 0.0
        %1273 = vmatpush1.msra.mxu0 0.0
        %1274 = vmatprep.subr.mxu0 0.0
        %1275 = vmatpush1.msra.mxu0 0.0
        %1276 = vmatprep.subr.mxu0 0.0
        %1277 = vmatpush1.msra.mxu0 0.0
        %1278 = vmatprep.subr.mxu0 0.0
        %1279 = vmatpush1.msra.mxu0 0.0
        %1280 = vmatprep.subr.mxu0 0.0
        %1281 = vmatpush1.msra.mxu0 0.0
        %1282 = vmatprep.subr.mxu0 0.0
        %1283 = vmatpush1.msra.mxu0 0.0
        %1284 = vmatprep.subr.mxu0 0.0
        %1285 = vmatpush1.msra.mxu0 0.0
        %1286 = vmatprep.subr.mxu0 0.0
        %1287 = vmatpush1.msra.mxu0 0.0
        %1288 = vmatprep.subr.mxu0 0.0
        %1289 = vmatpush1.msra.mxu0 0.0
        %1290 = vmatprep.subr.mxu0 0.0
        %1291 = vmatpush1.msra.mxu0 0.0
        %1292 = vmatprep.subr.mxu0 0.0
        %1293 = vmatpush1.msra.mxu0 0.0
        %1294 = vmatprep.subr.mxu0 %v787
        %1295 = vmatpush1.msra.mxu0 %v786
        %1296 = vmatprep.subr.mxu0 %v755
        %1297 = vmatpush1.msra.mxu0 %v754
        %1298 = vmatprep.subr.mxu0 0.0
        %1299 = vmatpush2.msra.mxu0 0.0
        %1300 = vmatprep.subr.mxu0 0.0
        %1301 = vmatpush2.msra.mxu0 0.0
        %1302 = vmatprep.subr.mxu0 0.0
        %1303 = vmatpush2.msra.mxu0 0.0
        %1304 = vmatprep.subr.mxu0 0.0
        %1305 = vmatpush2.msra.mxu0 0.0
        %1306 = vmatprep.subr.mxu0 0.0
        %1307 = vmatpush2.msra.mxu0 0.0
        %1308 = vmatprep.subr.mxu0 0.0
        %1309 = vmatpush2.msra.mxu0 0.0
        %1310 = vmatprep.subr.mxu0 0.0
        %1311 = vmatpush2.msra.mxu0 0.0
        %1312 = vmatprep.subr.mxu0 0.0
        %1313 = vmatpush2.msra.mxu0 0.0
        %1314 = vmatprep.subr.mxu0 0.0
        %1315 = vmatpush2.msra.mxu0 0.0
        %1316 = vmatprep.subr.mxu0 0.0
        %1317 = vmatpush2.msra.mxu0 0.0
        %1318 = vmatprep.subr.mxu0 0.0
        %1319 = vmatpush2.msra.mxu0 0.0
        %1320 = vmatprep.subr.mxu0 0.0
        %1321 = vmatpush2.msra.mxu0 0.0
        %1322 = vmatprep.subr.mxu0 0.0
        %1323 = vmatpush2.msra.mxu0 0.0
        %1324 = vmatprep.subr.mxu0 0.0
        %1325 = vmatpush2.msra.mxu0 0.0
        %1326 = vmatprep.subr.mxu0 0.0
        %1327 = vmatpush2.msra.mxu0 0.0
        %1328 = vmatprep.subr.mxu0 0.0
        %1329 = vmatpush2.msra.mxu0 0.0
        %1330 = vmatprep.mubr.f32.mxu0 0.0
        %1331 = vmatmul.mubr.f32.gmra.mxu0 %v876
        %v1332 = vpop.f32.mrf.mxu0
        %v1333 = vadd.f32 %v820, %v1332
        %v1334 = vpop.f32.mrf.mxu0
        %v1335 = vadd.f32 %v821, %v1334
        %1336 = vmatprep.mubr.f32.mxu0 0.0
        %1337 = vmatmul.mubr.f32.gmra.mxu0 %v879
        %v1338 = vpop.f32.mrf.mxu0
        %v1339 = vadd.f32 %v852, %v1338
        %v1340 = vpop.f32.mrf.mxu0
        %v1341 = vadd.f32 %v853, %v1340
        %1342 = vdwg.mxu0
        %1343 = vmatprep.subr.mxu0 0.0
        %1344 = vmatpush1.msra.mxu0 0.0
        %1345 = vmatprep.subr.mxu0 0.0
        %1346 = vmatpush1.msra.mxu0 0.0
        %1347 = vmatprep.subr.mxu0 0.0
        %1348 = vmatpush1.msra.mxu0 0.0
        %1349 = vmatprep.subr.mxu0 0.0
        %1350 = vmatpush1.msra.mxu0 0.0
        %1351 = vmatprep.subr.mxu0 0.0
        %1352 = vmatpush1.msra.mxu0 0.0
        %1353 = vmatprep.subr.mxu0 0.0
        %1354 = vmatpush1.msra.mxu0 0.0
        %1355 = vmatprep.subr.mxu0 0.0
        %1356 = vmatpush1.msra.mxu0 0.0
        %1357 = vmatprep.subr.mxu0 0.0
        %1358 = vmatpush1.msra.mxu0 0.0
        %1359 = vmatprep.subr.mxu0 0.0
        %1360 = vmatpush1.msra.mxu0 0.0
        %1361 = vmatprep.subr.mxu0 0.0
        %1362 = vmatpush1.msra.mxu0 0.0
        %1363 = vmatprep.subr.mxu0 0.0
        %1364 = vmatpush1.msra.mxu0 0.0
        %1365 = vmatprep.subr.mxu0 0.0
        %1366 = vmatpush1.msra.mxu0 0.0
        %1367 = vmatprep.subr.mxu0 0.0
        %1368 = vmatpush1.msra.mxu0 0.0
        %1369 = vmatprep.subr.mxu0 0.0
        %1370 = vmatpush1.msra.mxu0 0.0
        %1371 = vmatprep.subr.mxu0 %v789
        %1372 = vmatpush1.msra.mxu0 %v788
        %1373 = vmatprep.subr.mxu0 %v757
        %1374 = vmatpush1.msra.mxu0 %v756
        %1375 = vmatprep.subr.mxu0 0.0
        %1376 = vmatpush2.msra.mxu0 0.0
        %1377 = vmatprep.subr.mxu0 0.0
        %1378 = vmatpush2.msra.mxu0 0.0
        %1379 = vmatprep.subr.mxu0 0.0
        %1380 = vmatpush2.msra.mxu0 0.0
        %1381 = vmatprep.subr.mxu0 0.0
        %1382 = vmatpush2.msra.mxu0 0.0
        %1383 = vmatprep.subr.mxu0 0.0
        %1384 = vmatpush2.msra.mxu0 0.0
        %1385 = vmatprep.subr.mxu0 0.0
        %1386 = vmatpush2.msra.mxu0 0.0
        %1387 = vmatprep.subr.mxu0 0.0
        %1388 = vmatpush2.msra.mxu0 0.0
        %1389 = vmatprep.subr.mxu0 0.0
        %1390 = vmatpush2.msra.mxu0 0.0
        %1391 = vmatprep.subr.mxu0 0.0
        %1392 = vmatpush2.msra.mxu0 0.0
        %1393 = vmatprep.subr.mxu0 0.0
        %1394 = vmatpush2.msra.mxu0 0.0
        %1395 = vmatprep.subr.mxu0 0.0
        %1396 = vmatpush2.msra.mxu0 0.0
        %1397 = vmatprep.subr.mxu0 0.0
        %1398 = vmatpush2.msra.mxu0 0.0
        %1399 = vmatprep.subr.mxu0 0.0
        %1400 = vmatpush2.msra.mxu0 0.0
        %1401 = vmatprep.subr.mxu0 0.0
        %1402 = vmatpush2.msra.mxu0 0.0
        %1403 = vmatprep.subr.mxu0 0.0
        %1404 = vmatpush2.msra.mxu0 0.0
        %1405 = vmatprep.subr.mxu0 0.0
        %1406 = vmatpush2.msra.mxu0 0.0
        %1407 = vmatprep.mubr.f32.mxu0 0.0
        %1408 = vmatmul.mubr.f32.gmra.mxu0 %v876
        %v1409 = vpop.f32.mrf.mxu0
        %v1410 = vadd.f32 %v822, %v1409
        %v1411 = vpop.f32.mrf.mxu0
        %v1412 = vadd.f32 %v823, %v1411
        %1413 = vmatprep.mubr.f32.mxu0 0.0
        %1414 = vmatmul.mubr.f32.gmra.mxu0 %v879
        %v1415 = vpop.f32.mrf.mxu0
        %v1416 = vadd.f32 %v854, %v1415
        %v1417 = vpop.f32.mrf.mxu0
        %v1418 = vadd.f32 %v855, %v1417
        %1419 = vdwg.mxu0
        %1420 = vmatprep.subr.mxu0 0.0
        %1421 = vmatpush1.msra.mxu0 0.0
        %1422 = vmatprep.subr.mxu0 0.0
        %1423 = vmatpush1.msra.mxu0 0.0
        %1424 = vmatprep.subr.mxu0 0.0
        %1425 = vmatpush1.msra.mxu0 0.0
        %1426 = vmatprep.subr.mxu0 0.0
        %1427 = vmatpush1.msra.mxu0 0.0
        %1428 = vmatprep.subr.mxu0 0.0
        %1429 = vmatpush1.msra.mxu0 0.0
        %1430 = vmatprep.subr.mxu0 0.0
        %1431 = vmatpush1.msra.mxu0 0.0
        %1432 = vmatprep.subr.mxu0 0.0
        %1433 = vmatpush1.msra.mxu0 0.0
        %1434 = vmatprep.subr.mxu0 0.0
        %1435 = vmatpush1.msra.mxu0 0.0
        %1436 = vmatprep.subr.mxu0 0.0
        %1437 = vmatpush1.msra.mxu0 0.0
        %1438 = vmatprep.subr.mxu0 0.0
        %1439 = vmatpush1.msra.mxu0 0.0
        %1440 = vmatprep.subr.mxu0 0.0
        %1441 = vmatpush1.msra.mxu0 0.0
        %1442 = vmatprep.subr.mxu0 0.0
        %1443 = vmatpush1.msra.mxu0 0.0
        %1444 = vmatprep.subr.mxu0 0.0
        %1445 = vmatpush1.msra.mxu0 0.0
        %1446 = vmatprep.subr.mxu0 0.0
        %1447 = vmatpush1.msra.mxu0 0.0
        %1448 = vmatprep.subr.mxu0 %v791
        %1449 = vmatpush1.msra.mxu0 %v790
        %1450 = vmatprep.subr.mxu0 %v759
        %1451 = vmatpush1.msra.mxu0 %v758
        %1452 = vmatprep.subr.mxu0 0.0
        %1453 = vmatpush2.msra.mxu0 0.0
        %1454 = vmatprep.subr.mxu0 0.0
        %1455 = vmatpush2.msra.mxu0 0.0
        %1456 = vmatprep.subr.mxu0 0.0
        %1457 = vmatpush2.msra.mxu0 0.0
        %1458 = vmatprep.subr.mxu0 0.0
        %1459 = vmatpush2.msra.mxu0 0.0
        %1460 = vmatprep.subr.mxu0 0.0
        %1461 = vmatpush2.msra.mxu0 0.0
        %1462 = vmatprep.subr.mxu0 0.0
        %1463 = vmatpush2.msra.mxu0 0.0
        %1464 = vmatprep.subr.mxu0 0.0
        %1465 = vmatpush2.msra.mxu0 0.0
        %1466 = vmatprep.subr.mxu0 0.0
        %1467 = vmatpush2.msra.mxu0 0.0
        %1468 = vmatprep.subr.mxu0 0.0
        %1469 = vmatpush2.msra.mxu0 0.0
        %1470 = vmatprep.subr.mxu0 0.0
        %1471 = vmatpush2.msra.mxu0 0.0
        %1472 = vmatprep.subr.mxu0 0.0
        %1473 = vmatpush2.msra.mxu0 0.0
        %1474 = vmatprep.subr.mxu0 0.0
        %1475 = vmatpush2.msra.mxu0 0.0
        %1476 = vmatprep.subr.mxu0 0.0
        %1477 = vmatpush2.msra.mxu0 0.0
        %1478 = vmatprep.subr.mxu0 0.0
        %1479 = vmatpush2.msra.mxu0 0.0
        %1480 = vmatprep.subr.mxu0 0.0
        %1481 = vmatpush2.msra.mxu0 0.0
        %1482 = vmatprep.subr.mxu0 0.0
        %1483 = vmatpush2.msra.mxu0 0.0
        %1484 = vmatprep.mubr.f32.mxu0 0.0
        %1485 = vmatmul.mubr.f32.gmra.mxu0 %v876
        %v1486 = vpop.f32.mrf.mxu0
        %v1487 = vadd.f32 %v824, %v1486
        %v1488 = vpop.f32.mrf.mxu0
        %v1489 = vadd.f32 %v825, %v1488
        %1490 = vmatprep.mubr.f32.mxu0 0.0
        %1491 = vmatmul.mubr.f32.gmra.mxu0 %v879
        %v1492 = vpop.f32.mrf.mxu0
        %v1493 = vadd.f32 %v856, %v1492
        %v1494 = vpop.f32.mrf.mxu0
        %v1495 = vadd.f32 %v857, %v1494
        %1496 = vdwg.mxu0
        %1497 = vmatprep.subr.mxu0 0.0
        %1498 = vmatpush1.msra.mxu0 0.0
        %1499 = vmatprep.subr.mxu0 0.0
        %1500 = vmatpush1.msra.mxu0 0.0
        %1501 = vmatprep.subr.mxu0 0.0
        %1502 = vmatpush1.msra.mxu0 0.0
        %1503 = vmatprep.subr.mxu0 0.0
        %1504 = vmatpush1.msra.mxu0 0.0
        %1505 = vmatprep.subr.mxu0 0.0
        %1506 = vmatpush1.msra.mxu0 0.0
        %1507 = vmatprep.subr.mxu0 0.0
        %1508 = vmatpush1.msra.mxu0 0.0
        %1509 = vmatprep.subr.mxu0 0.0
        %1510 = vmatpush1.msra.mxu0 0.0
        %1511 = vmatprep.subr.mxu0 0.0
        %1512 = vmatpush1.msra.mxu0 0.0
        %1513 = vmatprep.subr.mxu0 0.0
        %1514 = vmatpush1.msra.mxu0 0.0
        %1515 = vmatprep.subr.mxu0 0.0
        %1516 = vmatpush1.msra.mxu0 0.0
        %1517 = vmatprep.subr.mxu0 0.0
        %1518 = vmatpush1.msra.mxu0 0.0
        %1519 = vmatprep.subr.mxu0 0.0
        %1520 = vmatpush1.msra.mxu0 0.0
        %1521 = vmatprep.subr.mxu0 0.0
        %1522 = vmatpush1.msra.mxu0 0.0
        %1523 = vmatprep.subr.mxu0 0.0
        %1524 = vmatpush1.msra.mxu0 0.0
        %1525 = vmatprep.subr.mxu0 %v793
        %1526 = vmatpush1.msra.mxu0 %v792
        %1527 = vmatprep.subr.mxu0 %v761
        %1528 = vmatpush1.msra.mxu0 %v760
        %1529 = vmatprep.subr.mxu0 0.0
        %1530 = vmatpush2.msra.mxu0 0.0
        %1531 = vmatprep.subr.mxu0 0.0
        %1532 = vmatpush2.msra.mxu0 0.0
        %1533 = vmatprep.subr.mxu0 0.0
        %1534 = vmatpush2.msra.mxu0 0.0
        %1535 = vmatprep.subr.mxu0 0.0
        %1536 = vmatpush2.msra.mxu0 0.0
        %1537 = vmatprep.subr.mxu0 0.0
        %1538 = vmatpush2.msra.mxu0 0.0
        %1539 = vmatprep.subr.mxu0 0.0
        %1540 = vmatpush2.msra.mxu0 0.0
        %1541 = vmatprep.subr.mxu0 0.0
        %1542 = vmatpush2.msra.mxu0 0.0
        %1543 = vmatprep.subr.mxu0 0.0
        %1544 = vmatpush2.msra.mxu0 0.0
        %1545 = vmatprep.subr.mxu0 0.0
        %1546 = vmatpush2.msra.mxu0 0.0
        %1547 = vmatprep.subr.mxu0 0.0
        %1548 = vmatpush2.msra.mxu0 0.0
        %1549 = vmatprep.subr.mxu0 0.0
        %1550 = vmatpush2.msra.mxu0 0.0
        %1551 = vmatprep.subr.mxu0 0.0
        %1552 = vmatpush2.msra.mxu0 0.0
        %1553 = vmatprep.subr.mxu0 0.0
        %1554 = vmatpush2.msra.mxu0 0.0
        %1555 = vmatprep.subr.mxu0 0.0
        %1556 = vmatpush2.msra.mxu0 0.0
        %1557 = vmatprep.subr.mxu0 0.0
        %1558 = vmatpush2.msra.mxu0 0.0
        %1559 = vmatprep.subr.mxu0 0.0
        %1560 = vmatpush2.msra.mxu0 0.0
        %1561 = vmatprep.mubr.f32.mxu0 0.0
        %1562 = vmatmul.mubr.f32.gmra.mxu0 %v876
        %v1563 = vpop.f32.mrf.mxu0
        %v1564 = vadd.f32 %v826, %v1563
        %v1565 = vpop.f32.mrf.mxu0
        %v1566 = vadd.f32 %v827, %v1565
        %1567 = vmatprep.mubr.f32.mxu0 0.0
        %1568 = vmatmul.mubr.f32.gmra.mxu0 %v879
        %v1569 = vpop.f32.mrf.mxu0
        %v1570 = vadd.f32 %v858, %v1569
        %v1571 = vpop.f32.mrf.mxu0
        %v1572 = vadd.f32 %v859, %v1571
        %1573 = vdwg.mxu0
        %1574 = vmatprep.subr.mxu0 0.0
        %1575 = vmatpush1.msra.mxu0 0.0
        %1576 = vmatprep.subr.mxu0 0.0
        %1577 = vmatpush1.msra.mxu0 0.0
        %1578 = vmatprep.subr.mxu0 0.0
        %1579 = vmatpush1.msra.mxu0 0.0
        %1580 = vmatprep.subr.mxu0 0.0
        %1581 = vmatpush1.msra.mxu0 0.0
        %1582 = vmatprep.subr.mxu0 0.0
        %1583 = vmatpush1.msra.mxu0 0.0
        %1584 = vmatprep.subr.mxu0 0.0
        %1585 = vmatpush1.msra.mxu0 0.0
        %1586 = vmatprep.subr.mxu0 0.0
        %1587 = vmatpush1.msra.mxu0 0.0
        %1588 = vmatprep.subr.mxu0 0.0
        %1589 = vmatpush1.msra.mxu0 0.0
        %1590 = vmatprep.subr.mxu0 0.0
        %1591 = vmatpush1.msra.mxu0 0.0
        %1592 = vmatprep.subr.mxu0 0.0
        %1593 = vmatpush1.msra.mxu0 0.0
        %1594 = vmatprep.subr.mxu0 0.0
        %1595 = vmatpush1.msra.mxu0 0.0
        %1596 = vmatprep.subr.mxu0 0.0
        %1597 = vmatpush1.msra.mxu0 0.0
        %1598 = vmatprep.subr.mxu0 0.0
        %1599 = vmatpush1.msra.mxu0 0.0
        %1600 = vmatprep.subr.mxu0 0.0
        %1601 = vmatpush1.msra.mxu0 0.0
        %1602 = vmatprep.subr.mxu0 %v795
        %1603 = vmatpush1.msra.mxu0 %v794
        %1604 = vmatprep.subr.mxu0 %v763
        %1605 = vmatpush1.msra.mxu0 %v762
        %1606 = vmatprep.subr.mxu0 0.0
        %1607 = vmatpush2.msra.mxu0 0.0
        %1608 = vmatprep.subr.mxu0 0.0
        %1609 = vmatpush2.msra.mxu0 0.0
        %1610 = vmatprep.subr.mxu0 0.0
        %1611 = vmatpush2.msra.mxu0 0.0
        %1612 = vmatprep.subr.mxu0 0.0
        %1613 = vmatpush2.msra.mxu0 0.0
        %1614 = vmatprep.subr.mxu0 0.0
        %1615 = vmatpush2.msra.mxu0 0.0
        %1616 = vmatprep.subr.mxu0 0.0
        %1617 = vmatpush2.msra.mxu0 0.0
        %1618 = vmatprep.subr.mxu0 0.0
        %1619 = vmatpush2.msra.mxu0 0.0
        %1620 = vmatprep.subr.mxu0 0.0
        %1621 = vmatpush2.msra.mxu0 0.0
        %1622 = vmatprep.subr.mxu0 0.0
        %1623 = vmatpush2.msra.mxu0 0.0
        %1624 = vmatprep.subr.mxu0 0.0
        %1625 = vmatpush2.msra.mxu0 0.0
        %1626 = vmatprep.subr.mxu0 0.0
        %1627 = vmatpush2.msra.mxu0 0.0
        %1628 = vmatprep.subr.mxu0 0.0
        %1629 = vmatpush2.msra.mxu0 0.0
        %1630 = vmatprep.subr.mxu0 0.0
        %1631 = vmatpush2.msra.mxu0 0.0
        %1632 = vmatprep.subr.mxu0 0.0
        %1633 = vmatpush2.msra.mxu0 0.0
        %1634 = vmatprep.subr.mxu0 0.0
        %1635 = vmatpush2.msra.mxu0 0.0
        %1636 = vmatprep.subr.mxu0 0.0
        %1637 = vmatpush2.msra.mxu0 0.0
        %1638 = vmatprep.mubr.f32.mxu0 0.0
        %1639 = vmatmul.mubr.f32.gmra.mxu0 %v876
        %v1640 = vpop.f32.mrf.mxu0
        %v1641 = vadd.f32 %v828, %v1640
        %v1642 = vpop.f32.mrf.mxu0
        %v1643 = vadd.f32 %v829, %v1642
        %1644 = vmatprep.mubr.f32.mxu0 0.0
        %1645 = vmatmul.mubr.f32.gmra.mxu0 %v879
        %v1646 = vpop.f32.mrf.mxu0
        %v1647 = vadd.f32 %v860, %v1646
        %v1648 = vpop.f32.mrf.mxu0
        %v1649 = vadd.f32 %v861, %v1648
        %1650 = vdwg.mxu0
        %1651 = vmatprep.subr.mxu0 0.0
        %1652 = vmatpush1.msra.mxu0 0.0
        %1653 = vmatprep.subr.mxu0 0.0
        %1654 = vmatpush1.msra.mxu0 0.0
        %1655 = vmatprep.subr.mxu0 0.0
        %1656 = vmatpush1.msra.mxu0 0.0
        %1657 = vmatprep.subr.mxu0 0.0
        %1658 = vmatpush1.msra.mxu0 0.0
        %1659 = vmatprep.subr.mxu0 0.0
        %1660 = vmatpush1.msra.mxu0 0.0
        %1661 = vmatprep.subr.mxu0 0.0
        %1662 = vmatpush1.msra.mxu0 0.0
        %1663 = vmatprep.subr.mxu0 0.0
        %1664 = vmatpush1.msra.mxu0 0.0
        %1665 = vmatprep.subr.mxu0 0.0
        %1666 = vmatpush1.msra.mxu0 0.0
        %1667 = vmatprep.subr.mxu0 0.0
        %1668 = vmatpush1.msra.mxu0 0.0
        %1669 = vmatprep.subr.mxu0 0.0
        %1670 = vmatpush1.msra.mxu0 0.0
        %1671 = vmatprep.subr.mxu0 0.0
        %1672 = vmatpush1.msra.mxu0 0.0
        %1673 = vmatprep.subr.mxu0 0.0
        %1674 = vmatpush1.msra.mxu0 0.0
        %1675 = vmatprep.subr.mxu0 0.0
        %1676 = vmatpush1.msra.mxu0 0.0
        %1677 = vmatprep.subr.mxu0 0.0
        %1678 = vmatpush1.msra.mxu0 0.0
        %1679 = vmatprep.subr.mxu0 %v797
        %1680 = vmatpush1.msra.mxu0 %v796
        %1681 = vmatprep.subr.mxu0 %v765
        %1682 = vmatpush1.msra.mxu0 %v764
        %1683 = vmatprep.subr.mxu0 0.0
        %1684 = vmatpush2.msra.mxu0 0.0
        %1685 = vmatprep.subr.mxu0 0.0
        %1686 = vmatpush2.msra.mxu0 0.0
        %1687 = vmatprep.subr.mxu0 0.0
        %1688 = vmatpush2.msra.mxu0 0.0
        %1689 = vmatprep.subr.mxu0 0.0
        %1690 = vmatpush2.msra.mxu0 0.0
        %1691 = vmatprep.subr.mxu0 0.0
        %1692 = vmatpush2.msra.mxu0 0.0
        %1693 = vmatprep.subr.mxu0 0.0
        %1694 = vmatpush2.msra.mxu0 0.0
        %1695 = vmatprep.subr.mxu0 0.0
        %1696 = vmatpush2.msra.mxu0 0.0
        %1697 = vmatprep.subr.mxu0 0.0
        %1698 = vmatpush2.msra.mxu0 0.0
        %1699 = vmatprep.subr.mxu0 0.0
        %1700 = vmatpush2.msra.mxu0 0.0
        %1701 = vmatprep.subr.mxu0 0.0
        %1702 = vmatpush2.msra.mxu0 0.0
        %1703 = vmatprep.subr.mxu0 0.0
        %1704 = vmatpush2.msra.mxu0 0.0
        %1705 = vmatprep.subr.mxu0 0.0
        %1706 = vmatpush2.msra.mxu0 0.0
        %1707 = vmatprep.subr.mxu0 0.0
        %1708 = vmatpush2.msra.mxu0 0.0
        %1709 = vmatprep.subr.mxu0 0.0
        %1710 = vmatpush2.msra.mxu0 0.0
        %1711 = vmatprep.subr.mxu0 0.0
        %1712 = vmatpush2.msra.mxu0 0.0
        %1713 = vmatprep.subr.mxu0 0.0
        %1714 = vmatpush2.msra.mxu0 0.0
        %1715 = vmatprep.mubr.f32.mxu0 0.0
        %1716 = vmatmul.mubr.f32.gmra.mxu0 %v876
        %v1717 = vpop.f32.mrf.mxu0
        %v1718 = vadd.f32 %v830, %v1717
        %v1719 = vpop.f32.mrf.mxu0
        %v1720 = vadd.f32 %v831, %v1719
        %1721 = vmatprep.mubr.f32.mxu0 0.0
        %1722 = vmatmul.mubr.f32.gmra.mxu0 %v879
        %v1723 = vpop.f32.mrf.mxu0
        %v1724 = vadd.f32 %v862, %v1723
        %v1725 = vpop.f32.mrf.mxu0
        %v1726 = vadd.f32 %v863, %v1725
        %1727 = vdwg.mxu0
        %1728 = vmatprep.subr.mxu0 0.0
        %1729 = vmatpush1.msra.mxu0 0.0
        %1730 = vmatprep.subr.mxu0 0.0
        %1731 = vmatpush1.msra.mxu0 0.0
        %1732 = vmatprep.subr.mxu0 0.0
        %1733 = vmatpush1.msra.mxu0 0.0
        %1734 = vmatprep.subr.mxu0 0.0
        %1735 = vmatpush1.msra.mxu0 0.0
        %1736 = vmatprep.subr.mxu0 0.0
        %1737 = vmatpush1.msra.mxu0 0.0
        %1738 = vmatprep.subr.mxu0 0.0
        %1739 = vmatpush1.msra.mxu0 0.0
        %1740 = vmatprep.subr.mxu0 0.0
        %1741 = vmatpush1.msra.mxu0 0.0
        %1742 = vmatprep.subr.mxu0 0.0
        %1743 = vmatpush1.msra.mxu0 0.0
        %1744 = vmatprep.subr.mxu0 0.0
        %1745 = vmatpush1.msra.mxu0 0.0
        %1746 = vmatprep.subr.mxu0 0.0
        %1747 = vmatpush1.msra.mxu0 0.0
        %1748 = vmatprep.subr.mxu0 0.0
        %1749 = vmatpush1.msra.mxu0 0.0
        %1750 = vmatprep.subr.mxu0 0.0
        %1751 = vmatpush1.msra.mxu0 0.0
        %1752 = vmatprep.subr.mxu0 0.0
        %1753 = vmatpush1.msra.mxu0 0.0
        %1754 = vmatprep.subr.mxu0 0.0
        %1755 = vmatpush1.msra.mxu0 0.0
        %1756 = vmatprep.subr.mxu0 %v799
        %1757 = vmatpush1.msra.mxu0 %v798
        %1758 = vmatprep.subr.mxu0 %v767
        %1759 = vmatpush1.msra.mxu0 %v766
        %1760 = vmatprep.subr.mxu0 0.0
        %1761 = vmatpush2.msra.mxu0 0.0
        %1762 = vmatprep.subr.mxu0 0.0
        %1763 = vmatpush2.msra.mxu0 0.0
        %1764 = vmatprep.subr.mxu0 0.0
        %1765 = vmatpush2.msra.mxu0 0.0
        %1766 = vmatprep.subr.mxu0 0.0
        %1767 = vmatpush2.msra.mxu0 0.0
        %1768 = vmatprep.subr.mxu0 0.0
        %1769 = vmatpush2.msra.mxu0 0.0
        %1770 = vmatprep.subr.mxu0 0.0
        %1771 = vmatpush2.msra.mxu0 0.0
        %1772 = vmatprep.subr.mxu0 0.0
        %1773 = vmatpush2.msra.mxu0 0.0
        %1774 = vmatprep.subr.mxu0 0.0
        %1775 = vmatpush2.msra.mxu0 0.0
        %1776 = vmatprep.subr.mxu0 0.0
        %1777 = vmatpush2.msra.mxu0 0.0
        %1778 = vmatprep.subr.mxu0 0.0
        %1779 = vmatpush2.msra.mxu0 0.0
        %1780 = vmatprep.subr.mxu0 0.0
        %1781 = vmatpush2.msra.mxu0 0.0
        %1782 = vmatprep.subr.mxu0 0.0
        %1783 = vmatpush2.msra.mxu0 0.0
        %1784 = vmatprep.subr.mxu0 0.0
        %1785 = vmatpush2.msra.mxu0 0.0
        %1786 = vmatprep.subr.mxu0 0.0
        %1787 = vmatpush2.msra.mxu0 0.0
        %1788 = vmatprep.subr.mxu0 0.0
        %1789 = vmatpush2.msra.mxu0 0.0
        %1790 = vmatprep.subr.mxu0 0.0
        %1791 = vmatpush2.msra.mxu0 0.0
        %1792 = vmatprep.mubr.f32.mxu0 0.0
        %1793 = vmatmul.mubr.f32.gmra.mxu0 %v876
        %v1794 = vpop.f32.mrf.mxu0
        %v1795 = vadd.f32 %v832, %v1794
        %v1796 = vpop.f32.mrf.mxu0
        %v1797 = vadd.f32 %v833, %v1796
        %1798 = vmatprep.mubr.f32.mxu0 0.0
        %1799 = vmatmul.mubr.f32.gmra.mxu0 %v879
        %v1800 = vpop.f32.mrf.mxu0
        %v1801 = vadd.f32 %v864, %v1800
        %v1802 = vpop.f32.mrf.mxu0
        %v1803 = vadd.f32 %v865, %v1802
        %1804 = vdwg.mxu0
        %1805 = vmatprep.subr.mxu0 0.0
        %1806 = vmatpush1.msra.mxu0 0.0
        %1807 = vmatprep.subr.mxu0 0.0
        %1808 = vmatpush1.msra.mxu0 0.0
        %1809 = vmatprep.subr.mxu0 0.0
        %1810 = vmatpush1.msra.mxu0 0.0
        %1811 = vmatprep.subr.mxu0 0.0
        %1812 = vmatpush1.msra.mxu0 0.0
        %1813 = vmatprep.subr.mxu0 0.0
        %1814 = vmatpush1.msra.mxu0 0.0
        %1815 = vmatprep.subr.mxu0 0.0
        %1816 = vmatpush1.msra.mxu0 0.0
        %1817 = vmatprep.subr.mxu0 0.0
        %1818 = vmatpush1.msra.mxu0 0.0
        %1819 = vmatprep.subr.mxu0 0.0
        %1820 = vmatpush1.msra.mxu0 0.0
        %1821 = vmatprep.subr.mxu0 0.0
        %1822 = vmatpush1.msra.mxu0 0.0
        %1823 = vmatprep.subr.mxu0 0.0
        %1824 = vmatpush1.msra.mxu0 0.0
        %1825 = vmatprep.subr.mxu0 0.0
        %1826 = vmatpush1.msra.mxu0 0.0
        %1827 = vmatprep.subr.mxu0 0.0
        %1828 = vmatpush1.msra.mxu0 0.0
        %1829 = vmatprep.subr.mxu0 0.0
        %1830 = vmatpush1.msra.mxu0 0.0
        %1831 = vmatprep.subr.mxu0 0.0
        %1832 = vmatpush1.msra.mxu0 0.0
        %1833 = vmatprep.subr.mxu0 %v801
        %1834 = vmatpush1.msra.mxu0 %v800
        %1835 = vmatprep.subr.mxu0 %v769
        %1836 = vmatpush1.msra.mxu0 %v768
        %1837 = vmatprep.subr.mxu0 0.0
        %1838 = vmatpush2.msra.mxu0 0.0
        %1839 = vmatprep.subr.mxu0 0.0
        %1840 = vmatpush2.msra.mxu0 0.0
        %1841 = vmatprep.subr.mxu0 0.0
        %1842 = vmatpush2.msra.mxu0 0.0
        %1843 = vmatprep.subr.mxu0 0.0
        %1844 = vmatpush2.msra.mxu0 0.0
        %1845 = vmatprep.subr.mxu0 0.0
        %1846 = vmatpush2.msra.mxu0 0.0
        %1847 = vmatprep.subr.mxu0 0.0
        %1848 = vmatpush2.msra.mxu0 0.0
        %1849 = vmatprep.subr.mxu0 0.0
        %1850 = vmatpush2.msra.mxu0 0.0
        %1851 = vmatprep.subr.mxu0 0.0
        %1852 = vmatpush2.msra.mxu0 0.0
        %1853 = vmatprep.subr.mxu0 0.0
        %1854 = vmatpush2.msra.mxu0 0.0
        %1855 = vmatprep.subr.mxu0 0.0
        %1856 = vmatpush2.msra.mxu0 0.0
        %1857 = vmatprep.subr.mxu0 0.0
        %1858 = vmatpush2.msra.mxu0 0.0
        %1859 = vmatprep.subr.mxu0 0.0
        %1860 = vmatpush2.msra.mxu0 0.0
        %1861 = vmatprep.subr.mxu0 0.0
        %1862 = vmatpush2.msra.mxu0 0.0
        %1863 = vmatprep.subr.mxu0 0.0
        %1864 = vmatpush2.msra.mxu0 0.0
        %1865 = vmatprep.subr.mxu0 0.0
        %1866 = vmatpush2.msra.mxu0 0.0
        %1867 = vmatprep.subr.mxu0 0.0
        %1868 = vmatpush2.msra.mxu0 0.0
        %1869 = vmatprep.mubr.f32.mxu0 0.0
        %1870 = vmatmul.mubr.f32.gmra.mxu0 %v876
        %v1871 = vpop.f32.mrf.mxu0
        %v1872 = vadd.f32 %v834, %v1871
        %v1873 = vpop.f32.mrf.mxu0
        %v1874 = vadd.f32 %v835, %v1873
        %1875 = vmatprep.mubr.f32.mxu0 0.0
        %1876 = vmatmul.mubr.f32.gmra.mxu0 %v879
        %v1877 = vpop.f32.mrf.mxu0
        %v1878 = vadd.f32 %v866, %v1877
        %v1879 = vpop.f32.mrf.mxu0
        %v1880 = vadd.f32 %v867, %v1879
        %1881 = vdwg.mxu0
        %1882 = vmatprep.subr.mxu0 0.0
        %1883 = vmatpush1.msra.mxu0 0.0
        %1884 = vmatprep.subr.mxu0 0.0
        %1885 = vmatpush1.msra.mxu0 0.0
        %1886 = vmatprep.subr.mxu0 0.0
        %1887 = vmatpush1.msra.mxu0 0.0
        %1888 = vmatprep.subr.mxu0 0.0
        %1889 = vmatpush1.msra.mxu0 0.0
        %1890 = vmatprep.subr.mxu0 0.0
        %1891 = vmatpush1.msra.mxu0 0.0
        %1892 = vmatprep.subr.mxu0 0.0
        %1893 = vmatpush1.msra.mxu0 0.0
        %1894 = vmatprep.subr.mxu0 0.0
        %1895 = vmatpush1.msra.mxu0 0.0
        %1896 = vmatprep.subr.mxu0 0.0
        %1897 = vmatpush1.msra.mxu0 0.0
        %1898 = vmatprep.subr.mxu0 0.0
        %1899 = vmatpush1.msra.mxu0 0.0
        %1900 = vmatprep.subr.mxu0 0.0
        %1901 = vmatpush1.msra.mxu0 0.0
        %1902 = vmatprep.subr.mxu0 0.0
        %1903 = vmatpush1.msra.mxu0 0.0
        %1904 = vmatprep.subr.mxu0 0.0
        %1905 = vmatpush1.msra.mxu0 0.0
        %1906 = vmatprep.subr.mxu0 0.0
        %1907 = vmatpush1.msra.mxu0 0.0
        %1908 = vmatprep.subr.mxu0 0.0
        %1909 = vmatpush1.msra.mxu0 0.0
        %1910 = vmatprep.subr.mxu0 %v803
        %1911 = vmatpush1.msra.mxu0 %v802
        %1912 = vmatprep.subr.mxu0 %v771
        %1913 = vmatpush1.msra.mxu0 %v770
        %1914 = vmatprep.subr.mxu0 0.0
        %1915 = vmatpush2.msra.mxu0 0.0
        %1916 = vmatprep.subr.mxu0 0.0
        %1917 = vmatpush2.msra.mxu0 0.0
        %1918 = vmatprep.subr.mxu0 0.0
        %1919 = vmatpush2.msra.mxu0 0.0
        %1920 = vmatprep.subr.mxu0 0.0
        %1921 = vmatpush2.msra.mxu0 0.0
        %1922 = vmatprep.subr.mxu0 0.0
        %1923 = vmatpush2.msra.mxu0 0.0
        %1924 = vmatprep.subr.mxu0 0.0
        %1925 = vmatpush2.msra.mxu0 0.0
        %1926 = vmatprep.subr.mxu0 0.0
        %1927 = vmatpush2.msra.mxu0 0.0
        %1928 = vmatprep.subr.mxu0 0.0
        %1929 = vmatpush2.msra.mxu0 0.0
        %1930 = vmatprep.subr.mxu0 0.0
        %1931 = vmatpush2.msra.mxu0 0.0
        %1932 = vmatprep.subr.mxu0 0.0
        %1933 = vmatpush2.msra.mxu0 0.0
        %1934 = vmatprep.subr.mxu0 0.0
        %1935 = vmatpush2.msra.mxu0 0.0
        %1936 = vmatprep.subr.mxu0 0.0
        %1937 = vmatpush2.msra.mxu0 0.0
        %1938 = vmatprep.subr.mxu0 0.0
        %1939 = vmatpush2.msra.mxu0 0.0
        %1940 = vmatprep.subr.mxu0 0.0
        %1941 = vmatpush2.msra.mxu0 0.0
        %1942 = vmatprep.subr.mxu0 0.0
        %1943 = vmatpush2.msra.mxu0 0.0
        %1944 = vmatprep.subr.mxu0 0.0
        %1945 = vmatpush2.msra.mxu0 0.0
        %1946 = vmatprep.mubr.f32.mxu0 0.0
        %1947 = vmatmul.mubr.f32.gmra.mxu0 %v876
        %v1948 = vpop.f32.mrf.mxu0
        %v1949 = vadd.f32 %v836, %v1948
        %v1950 = vpop.f32.mrf.mxu0
        %v1951 = vadd.f32 %v837, %v1950
        %1952 = vmatprep.mubr.f32.mxu0 0.0
        %1953 = vmatmul.mubr.f32.gmra.mxu0 %v879
        %v1954 = vpop.f32.mrf.mxu0
        %v1955 = vadd.f32 %v868, %v1954
        %v1956 = vpop.f32.mrf.mxu0
        %v1957 = vadd.f32 %v869, %v1956
        %1958 = vdwg.mxu0
        %1959 = vmatprep.subr.mxu0 0.0
        %1960 = vmatpush1.msra.mxu0 0.0
        %1961 = vmatprep.subr.mxu0 0.0
        %1962 = vmatpush1.msra.mxu0 0.0
        %1963 = vmatprep.subr.mxu0 0.0
        %1964 = vmatpush1.msra.mxu0 0.0
        %1965 = vmatprep.subr.mxu0 0.0
        %1966 = vmatpush1.msra.mxu0 0.0
        %1967 = vmatprep.subr.mxu0 0.0
        %1968 = vmatpush1.msra.mxu0 0.0
        %1969 = vmatprep.subr.mxu0 0.0
        %1970 = vmatpush1.msra.mxu0 0.0
        %1971 = vmatprep.subr.mxu0 0.0
        %1972 = vmatpush1.msra.mxu0 0.0
        %1973 = vmatprep.subr.mxu0 0.0
        %1974 = vmatpush1.msra.mxu0 0.0
        %1975 = vmatprep.subr.mxu0 0.0
        %1976 = vmatpush1.msra.mxu0 0.0
        %1977 = vmatprep.subr.mxu0 0.0
        %1978 = vmatpush1.msra.mxu0 0.0
        %1979 = vmatprep.subr.mxu0 0.0
        %1980 = vmatpush1.msra.mxu0 0.0
        %1981 = vmatprep.subr.mxu0 0.0
        %1982 = vmatpush1.msra.mxu0 0.0
        %1983 = vmatprep.subr.mxu0 0.0
        %1984 = vmatpush1.msra.mxu0 0.0
        %1985 = vmatprep.subr.mxu0 0.0
        %1986 = vmatpush1.msra.mxu0 0.0
        %1987 = vmatprep.subr.mxu0 %v805
        %1988 = vmatpush1.msra.mxu0 %v804
        %1989 = vmatprep.subr.mxu0 %v773
        %1990 = vmatpush1.msra.mxu0 %v772
        %1991 = vmatprep.subr.mxu0 0.0
        %1992 = vmatpush2.msra.mxu0 0.0
        %1993 = vmatprep.subr.mxu0 0.0
        %1994 = vmatpush2.msra.mxu0 0.0
        %1995 = vmatprep.subr.mxu0 0.0
        %1996 = vmatpush2.msra.mxu0 0.0
        %1997 = vmatprep.subr.mxu0 0.0
        %1998 = vmatpush2.msra.mxu0 0.0
        %1999 = vmatprep.subr.mxu0 0.0
        %2000 = vmatpush2.msra.mxu0 0.0
        %2001 = vmatprep.subr.mxu0 0.0
        %2002 = vmatpush2.msra.mxu0 0.0
        %2003 = vmatprep.subr.mxu0 0.0
        %2004 = vmatpush2.msra.mxu0 0.0
        %2005 = vmatprep.subr.mxu0 0.0
        %2006 = vmatpush2.msra.mxu0 0.0
        %2007 = vmatprep.subr.mxu0 0.0
        %2008 = vmatpush2.msra.mxu0 0.0
        %2009 = vmatprep.subr.mxu0 0.0
        %2010 = vmatpush2.msra.mxu0 0.0
        %2011 = vmatprep.subr.mxu0 0.0
        %2012 = vmatpush2.msra.mxu0 0.0
        %2013 = vmatprep.subr.mxu0 0.0
        %2014 = vmatpush2.msra.mxu0 0.0
        %2015 = vmatprep.subr.mxu0 0.0
        %2016 = vmatpush2.msra.mxu0 0.0
        %2017 = vmatprep.subr.mxu0 0.0
        %2018 = vmatpush2.msra.mxu0 0.0
        %2019 = vmatprep.subr.mxu0 0.0
        %2020 = vmatpush2.msra.mxu0 0.0
        %2021 = vmatprep.subr.mxu0 0.0
        %2022 = vmatpush2.msra.mxu0 0.0
        %2023 = vmatprep.mubr.f32.mxu0 0.0
        %2024 = vmatmul.mubr.f32.gmra.mxu0 %v876
        %v2025 = vpop.f32.mrf.mxu0
        %v2026 = vadd.f32 %v838, %v2025
        %v2027 = vpop.f32.mrf.mxu0
        %v2028 = vadd.f32 %v839, %v2027
        %2029 = vmatprep.mubr.f32.mxu0 0.0
        %2030 = vmatmul.mubr.f32.gmra.mxu0 %v879
        %v2031 = vpop.f32.mrf.mxu0
        %v2032 = vadd.f32 %v870, %v2031
        %v2033 = vpop.f32.mrf.mxu0
        %v2034 = vadd.f32 %v871, %v2033
        %2035 = vdwg.mxu0
        %2036 = vmatprep.subr.mxu0 0.0
        %2037 = vmatpush1.msra.mxu0 0.0
        %2038 = vmatprep.subr.mxu0 0.0
        %2039 = vmatpush1.msra.mxu0 0.0
        %2040 = vmatprep.subr.mxu0 0.0
        %2041 = vmatpush1.msra.mxu0 0.0
        %2042 = vmatprep.subr.mxu0 0.0
        %2043 = vmatpush1.msra.mxu0 0.0
        %2044 = vmatprep.subr.mxu0 0.0
        %2045 = vmatpush1.msra.mxu0 0.0
        %2046 = vmatprep.subr.mxu0 0.0
        %2047 = vmatpush1.msra.mxu0 0.0
        %2048 = vmatprep.subr.mxu0 0.0
        %2049 = vmatpush1.msra.mxu0 0.0
        %2050 = vmatprep.subr.mxu0 0.0
        %2051 = vmatpush1.msra.mxu0 0.0
        %2052 = vmatprep.subr.mxu0 0.0
        %2053 = vmatpush1.msra.mxu0 0.0
        %2054 = vmatprep.subr.mxu0 0.0
        %2055 = vmatpush1.msra.mxu0 0.0
        %2056 = vmatprep.subr.mxu0 0.0
        %2057 = vmatpush1.msra.mxu0 0.0
        %2058 = vmatprep.subr.mxu0 0.0
        %2059 = vmatpush1.msra.mxu0 0.0
        %2060 = vmatprep.subr.mxu0 0.0
        %2061 = vmatpush1.msra.mxu0 0.0
        %2062 = vmatprep.subr.mxu0 0.0
        %2063 = vmatpush1.msra.mxu0 0.0
        %2064 = vmatprep.subr.mxu0 %v807
        %2065 = vmatpush1.msra.mxu0 %v806
        %2066 = vmatprep.subr.mxu0 %v775
        %2067 = vmatpush1.msra.mxu0 %v774
        %2068 = vmatprep.subr.mxu0 0.0
        %2069 = vmatpush2.msra.mxu0 0.0
        %2070 = vmatprep.subr.mxu0 0.0
        %2071 = vmatpush2.msra.mxu0 0.0
        %2072 = vmatprep.subr.mxu0 0.0
        %2073 = vmatpush2.msra.mxu0 0.0
        %2074 = vmatprep.subr.mxu0 0.0
        %2075 = vmatpush2.msra.mxu0 0.0
        %2076 = vmatprep.subr.mxu0 0.0
        %2077 = vmatpush2.msra.mxu0 0.0
        %2078 = vmatprep.subr.mxu0 0.0
        %2079 = vmatpush2.msra.mxu0 0.0
        %2080 = vmatprep.subr.mxu0 0.0
        %2081 = vmatpush2.msra.mxu0 0.0
        %2082 = vmatprep.subr.mxu0 0.0
        %2083 = vmatpush2.msra.mxu0 0.0
        %2084 = vmatprep.subr.mxu0 0.0
        %2085 = vmatpush2.msra.mxu0 0.0
        %2086 = vmatprep.subr.mxu0 0.0
        %2087 = vmatpush2.msra.mxu0 0.0
        %2088 = vmatprep.subr.mxu0 0.0
        %2089 = vmatpush2.msra.mxu0 0.0
        %2090 = vmatprep.subr.mxu0 0.0
        %2091 = vmatpush2.msra.mxu0 0.0
        %2092 = vmatprep.subr.mxu0 0.0
        %2093 = vmatpush2.msra.mxu0 0.0
        %2094 = vmatprep.subr.mxu0 0.0
        %2095 = vmatpush2.msra.mxu0 0.0
        %2096 = vmatprep.subr.mxu0 0.0
        %2097 = vmatpush2.msra.mxu0 0.0
        %2098 = vmatprep.subr.mxu0 0.0
        %2099 = vmatpush2.msra.mxu0 0.0
        %2100 = vmatprep.mubr.f32.mxu0 0.0
        %2101 = vmatmul.mubr.f32.gmra.mxu0 %v876
        %v2102 = vpop.f32.mrf.mxu0
        %v2103 = vadd.f32 %v840, %v2102
        %v2104 = vpop.f32.mrf.mxu0
        %v2105 = vadd.f32 %v841, %v2104
        %2106 = vmatprep.mubr.f32.mxu0 0.0
        %2107 = vmatmul.mubr.f32.gmra.mxu0 %v879
        %v2108 = vpop.f32.mrf.mxu0
        %v2109 = vadd.f32 %v872, %v2108
        %v2110 = vpop.f32.mrf.mxu0
        %v2111 = vadd.f32 %v873, %v2110
        %2112 = vdwg.mxu0
        %2113 = vst [vmem:[%s298] sm:$0xff] %v948
        %2114 = vst [vmem:[%s298 + $0x8] sm:$0xff] %v950
        %2115 = vst [vmem:[%s298 + $0x10] sm:$0xff] %v1025
        %2116 = vst [vmem:[%s298 + $0x18] sm:$0xff] %v1027
        %2117 = vst [vmem:[%s298 + $0x20] sm:$0xff] %v1102
        %2118 = vst [vmem:[%s298 + $0x28] sm:$0xff] %v1104
        %2119 = vst [vmem:[%s298 + $0x30] sm:$0xff] %v1179
        %2120 = vst [vmem:[%s298 + $0x38] sm:$0xff] %v1181
        %2121 = vst [vmem:[%s298 + $0x40] sm:$0xff] %v1256
        %2122 = vst [vmem:[%s298 + $0x48] sm:$0xff] %v1258
        %2123 = vst [vmem:[%s298 + $0x50] sm:$0xff] %v1333
        %2124 = vst [vmem:[%s298 + $0x58] sm:$0xff] %v1335
        %2125 = vst [vmem:[%s298 + $0x60] sm:$0xff] %v1410
        %2126 = vst [vmem:[%s298 + $0x68] sm:$0xff] %v1412
        %2127 = vst [vmem:[%s298 + $0x70] sm:$0xff] %v1487
        %2128 = vst [vmem:[%s298 + $0x78] sm:$0xff] %v1489
        %2129 = vst [vmem:[%s298 + $0x80] sm:$0xff] %v1564
        %2130 = vst [vmem:[%s298 + $0x88] sm:$0xff] %v1566
        %2131 = vst [vmem:[%s298 + $0x90] sm:$0xff] %v1641
        %2132 = vst [vmem:[%s298 + $0x98] sm:$0xff] %v1643
        %2133 = vst [vmem:[%s298 + $0xa0] sm:$0xff] %v1718
        %2134 = vst [vmem:[%s298 + $0xa8] sm:$0xff] %v1720
        %2135 = vst [vmem:[%s298 + $0xb0] sm:$0xff] %v1795
        %2136 = vst [vmem:[%s298 + $0xb8] sm:$0xff] %v1797
        %2137 = vst [vmem:[%s298 + $0xc0] sm:$0xff] %v1872
        %2138 = vst [vmem:[%s298 + $0xc8] sm:$0xff] %v1874
        %2139 = vst [vmem:[%s298 + $0xd0] sm:$0xff] %v1949
        %2140 = vst [vmem:[%s298 + $0xd8] sm:$0xff] %v1951
        %2141 = vst [vmem:[%s298 + $0xe0] sm:$0xff] %v2026
        %2142 = vst [vmem:[%s298 + $0xe8] sm:$0xff] %v2028
        %2143 = vst [vmem:[%s298 + $0xf0] sm:$0xff] %v2103
        %2144 = vst [vmem:[%s298 + $0xf8] sm:$0xff] %v2105
        %2145 = vst [vmem:[%s298 + $0x100] sm:$0xff] %v954
        %2146 = vst [vmem:[%s298 + $0x108] sm:$0xff] %v956
        %2147 = vst [vmem:[%s298 + $0x110] sm:$0xff] %v1031
        %2148 = vst [vmem:[%s298 + $0x118] sm:$0xff] %v1033
        %2149 = vst [vmem:[%s298 + $0x120] sm:$0xff] %v1108
        %2150 = vst [vmem:[%s298 + $0x128] sm:$0xff] %v1110
        %2151 = vst [vmem:[%s298 + $0x130] sm:$0xff] %v1185
        %2152 = vst [vmem:[%s298 + $0x138] sm:$0xff] %v1187
        %2153 = vst [vmem:[%s298 + $0x140] sm:$0xff] %v1262
        %2154 = vst [vmem:[%s298 + $0x148] sm:$0xff] %v1264
        %2155 = vst [vmem:[%s298 + $0x150] sm:$0xff] %v1339
        %2156 = vst [vmem:[%s298 + $0x158] sm:$0xff] %v1341
        %2157 = vst [vmem:[%s298 + $0x160] sm:$0xff] %v1416
        %2158 = vst [vmem:[%s298 + $0x168] sm:$0xff] %v1418
        %2159 = vst [vmem:[%s298 + $0x170] sm:$0xff] %v1493
        %2160 = vst [vmem:[%s298 + $0x178] sm:$0xff] %v1495
        %2161 = vst [vmem:[%s298 + $0x180] sm:$0xff] %v1570
        %2162 = vst [vmem:[%s298 + $0x188] sm:$0xff] %v1572
        %2163 = vst [vmem:[%s298 + $0x190] sm:$0xff] %v1647
        %2164 = vst [vmem:[%s298 + $0x198] sm:$0xff] %v1649
        %2165 = vst [vmem:[%s298 + $0x1a0] sm:$0xff] %v1724
        %2166 = vst [vmem:[%s298 + $0x1a8] sm:$0xff] %v1726
        %2167 = vst [vmem:[%s298 + $0x1b0] sm:$0xff] %v1801
        %2168 = vst [vmem:[%s298 + $0x1b8] sm:$0xff] %v1803
        %2169 = vst [vmem:[%s298 + $0x1c0] sm:$0xff] %v1878
        %2170 = vst [vmem:[%s298 + $0x1c8] sm:$0xff] %v1880
        %2171 = vst [vmem:[%s298 + $0x1d0] sm:$0xff] %v1955
        %2172 = vst [vmem:[%s298 + $0x1d8] sm:$0xff] %v1957
        %2173 = vst [vmem:[%s298 + $0x1e0] sm:$0xff] %v2032
        %2174 = vst [vmem:[%s298 + $0x1e8] sm:$0xff] %v2034
        %2175 = vst [vmem:[%s298 + $0x1f0] sm:$0xff] %v2109
        %2176 = vst [vmem:[%s298 + $0x1f8] sm:$0xff] %v2111
        %s2177 = sand.u32 %s142, 1
        %s2178 = scalar_lea.sflag [#allocation4], %s2177
        %s2179 = sand.u32 %s142, 1
        %s2180 = smul.addr %s2179, 512
        %s2181 = scalar_lea.vmem [#allocation11], %s2180
        // Predicated region
        $region61: #{tpu_custom_call.1} parent=39 // pred_check
          %p2182 = pneg %p152
        $region62: #{tpu_custom_call.1} parent=39 // pred_check_branch
          %2184 = sbr.rel (%p2182) target = $region64
        $region63: #{tpu_custom_call.1} parent=39 // pred_region
          %s2185 = smul.u32 32, %s24
          %s2187 = ssub.s32 8192, 8192
          %2188 = vsyncadd %s2178, %s2187
          %s2189 = smul.addr %s2185, 128
          %s2190 = scalar_lea.hbm %s5, %s2189
          %s2191 = sshll.u32 %s2181, 4
          %s2192 = int_to_ptr.vmem [resolvable:$true] %s2191
          %2197 = dma.vmem_to_hbm [thread:$0]  %s2192, 8192, %s2190, %s2178, 4096, 8192, 256
        $region64: #{tpu_custom_call.1} parent=39 // pred_fallthru
          _
      $region40: #{tpu_custom_call.1} parent=5 // pred_fallthru
        _
      %p2198 = scmp.le.s32.totalorder 2, %s19
      // Predicated region
      $region65: #{tpu_custom_call.1} parent=5 // pred_check
        %p2199 = pneg %p2198
      $region66: #{tpu_custom_call.1} parent=5 // pred_check_branch
        %2201 = sbr.rel (%p2199) target = $region68
      $region67: #{tpu_custom_call.1} parent=5 // pred_region
        %s2202 = ssub.s32 %s19, 2
        // Predicated region
        $region69: #{tpu_custom_call.1} parent=67 // pred_check
          %p2203 = pneg %p158
        $region70: #{tpu_custom_call.1} parent=67 // pred_check_branch
          %2205 = sbr.rel (%p2203) target = $region72
        $region71: #{tpu_custom_call.1} parent=67 // pred_region
          %s2206 = sand.u32 %s143, 1
          %s2207 = scalar_lea.sflag [#allocation4], %s2206
          %s2208 = sand.u32 %s143, 1
          %s2209 = smul.addr %s2208, 512
          %s2210 = scalar_lea.vmem [#allocation11], %s2209
          %2211 = dma.done %s2207, 8192
        $region72: #{tpu_custom_call.1} parent=67 // pred_fallthru
          _
      $region68: #{tpu_custom_call.1} parent=5 // pred_fallthru
        _
    $region6: #{tpu_custom_call.1} parent=1 // loop_footer
      %s23 = sadd.s32 1, %s19
    $region7: #{tpu_custom_call.1} parent=1 // loop_footer_branch
      %18 = sbr.rel target = $region3
    $region8: #{tpu_custom_call.1} parent=1 // loop_exit
      _
    %2212 = vsyncpa [#allocation3], 1
    %s2213 = scalar_lea.sflag [#allocation3], 1
    %2214 = vsyncpa %s2213, 1
    %2215 = vsyncpa [#allocation6], 1
    %2216 = vsyncpa [#allocation9], 1
    %2217 = vsyncpa [#allocation4], 1
    %s2218 = scalar_lea.sflag [#allocation4], 1
    %2219 = vsyncpa %s2218, 1

</llo_original>
